<compile_context>
chip_gen: v5e
topology: v5e:2x2
jax: 0.10.0
libtpu: 0.0.40
codegen_flags: <defaults>
</compile_context>

<pallas_src>
import numpy as np
import jax
import jax.numpy as jnp
from jax.experimental import pallas as pl
from jax.experimental.pallas import tpu as pltpu


def _round_up(x, m):
    return (x + m - 1) // m * m


def _cdiv(a, b):
    return -(-a // b)


def _const_spec(shape):
    nd = len(shape)
    return pl.BlockSpec(shape, lambda i, _nd=nd: (0,) * _nd)


def _dense(h_bf16, w_ref, b_ref):
    # h: [M, K] bf16, w: [K, N] bf16, b: [1, N] f32  ->  [M, N] f32
    return jnp.dot(h_bf16, w_ref[...],
                   preferred_element_type=jnp.float32) + b_ref[...]


def _fused_kernel(x_ref,
                  w1, b1, w2, b2, w3, b3, w4, b4, w5, b5,
                  worep, borep, mask_ref, grp_ref,
                  wti, bti, wto, bto,
                  o_ref):
    # ---- feature MLP over flattened (batch*time) rows ----------------------
    h = x_ref[...]                                                   # [TM, n_in] bf16
    h = jnp.maximum(_dense(h, w1, b1), 0.0).astype(jnp.bfloat16)     # [TM, 32]
    h = jnp.maximum(_dense(h, w2, b2), 0.0).astype(jnp.bfloat16)     # [TM, 128]
    h = jnp.maximum(_dense(h, w3, b3), 0.0).astype(jnp.bfloat16)     # [TM, 512]
    h = jnp.maximum(_dense(h, w4, b4), 0.0).astype(jnp.bfloat16)     # [TM, 128]
    h = jnp.maximum(_dense(h, w5, b5), 0.0).astype(jnp.bfloat16)     # [TM, 32]

    # ---- output head + in-VMEM regroup: rows b*T_in+t  ->  [TB, T_in] ------
    # y_full[r, t'] == wo . h[r] + bo  for every column t' (lane-replicated head)
    y_full = _dense(h, worep, borep)                                 # [TM, T_in] f32
    # keep only the column t' == r % T_in
    y_msk = (y_full * mask_ref[...]).astype(jnp.bfloat16)            # [TM, T_in]
    # 0/1 grouping matmul: t_in[b, t] = y[b*T_in + t]
    t_in = jnp.dot(grp_ref[...], y_msk,
                   preferred_element_type=jnp.float32).astype(jnp.bfloat16)  # [TB, T_in]

    # ---- temporal MLP -------------------------------------------------------
    t_hid = jnp.maximum(_dense(t_in, wti, bti), 0.0).astype(jnp.bfloat16)    # [TB, 128]
    o_ref[...] = _dense(t_hid, wto, bto)                             # [TB, T_out] f32


def _pick_batch_tile(B):
    if B <= 16:
        return _round_up(max(B, 1), 16)
    # aim for >= 2 grid steps (v7x has 2 TensorCores) while keeping tiles modest
    return min(256, _round_up(_cdiv(B, 2), 16))


def mlp_model_time_series_numerical(x_cat, x_cont, params, T_in, T_out):
    """Forward of MLPModelTimeSeriesNumerical (n_output == 2 path, T_in > 1).

    x_cat: [B, n_cat, T_in], x_cont: [B, n_cont, T_in]  (PyTorch NCT layout)
    Returns [B, 1, T_out].
    """
    # TODO(synk): T_in == 1 and n_output > 2 branches of the original module
    # are not exercised by this configuration and are not implemented here.
    B = x_cat.shape[0]
    # permute(0,2,1) + cat(-1)  (tiny XLA glue feeding the single fused kernel)
    x = jnp.concatenate([jnp.transpose(x_cat, (0, 2, 1)),
                         jnp.transpose(x_cont, (0, 2, 1))],
                        axis=-1).astype(jnp.float32)                 # [B, T_in, n_in]
    n_input = x.shape[-1]

    # pre-transpose weights once to [in, out] bf16; biases [1, out] f32
    wts = [(w.T.astype(jnp.bfloat16), b.reshape(1, -1).astype(jnp.float32))
           for (w, b) in params]
    (w1, b1), (w2, b2), (w3, b3), (w4, b4), (w5, b5), (wo, bo), \
        (wti, bti), (wto, bto) = wts

    # ---- tiling: whole batches per tile -------------------------------------
    TB = _pick_batch_tile(B)            # batches per tile (multiple of 16)
    Bp = _round_up(B, TB)
    TM = TB * T_in                      # flattened (batch*time) rows per tile

    x_flat = x.reshape(B * T_in, n_input).astype(jnp.bfloat16)
    if Bp != B:
        x_flat = jnp.pad(x_flat, ((0, (Bp - B) * T_in), (0, 0)))

    # lane-replicated output head (removes the N=1 matmul)
    worep = jnp.broadcast_to(wo, (wo.shape[0], T_in)).astype(jnp.bfloat16)  # [32, T_in]
    borep = jnp.broadcast_to(bo, (1, T_in)).astype(jnp.float32)             # [1, T_in]

    # tile-local regroup constants (identical for every tile: tiles hold whole batches)
    r = np.arange(TM)
    mask = jnp.asarray(r[:, None] % T_in == np.arange(T_in)[None, :],
                       jnp.float32)                                  # [TM, T_in]
    grp = jnp.asarray(np.arange(TB)[:, None] == (r[None, :] // T_in),
                      jnp.bfloat16)                                  # [TB, TM]

    const_args = [w1, b1, w2, b2, w3, b3, w4, b4, w5, b5,
                  worep, borep, mask, grp, wti, bti, wto, bto]

    out = pl.pallas_call(
        _fused_kernel,
        out_shape=jax.ShapeDtypeStruct((Bp, T_out), jnp.float32),
        grid=(Bp // TB,),
        in_specs=[pl.BlockSpec((TM, n_input), lambda i: (i, 0))]
                 + [_const_spec(a.shape) for a in const_args],
        out_specs=pl.BlockSpec((TB, T_out), lambda i: (i, 0)),
        compiler_params=pltpu.CompilerParams(
            dimension_semantics=("parallel",),
            vmem_limit_bytes=32 * 1024 * 1024),
    )(x_flat, *const_args)

    return out[:B].reshape(B, 1, T_out)                              # [B, 1, T_out]


# ----------------------------------------------------------------------------
# deterministic parameter init (xavier_uniform weights, bias = 0.01)
# ----------------------------------------------------------------------------
def _xavier_uniform(key, shape):
    fan_out, fan_in = shape
    bound = (6.0 / (fan_in + fan_out)) ** 0.5
    return jax.random.uniform(key, shape, jnp.float32, -bound, bound)


def init_params(key, n_input, T_in, T_out):
    shapes = [
        (32, n_input),    # lin_input
        (128, 32),        # lin_hidden[0]
        (512, 128),       # lin_hidden[1]
        (128, 512),       # lin_hidden[2]
        (32, 128),        # lin_hidden[3]
        (1, 32),          # lin_output (out-dim 1 for n_output == 2)
        (128, T_in),      # lin_input_temporal
        (T_out, 128),     # lin_output_temporal
    ]
    keys = jax.random.split(key, len(shapes))
    params = []
    for k, s in zip(keys, shapes):
        w = _xavier_uniform(k, s)
        b = jnp.full((1, s[0]), 0.01, jnp.float32)
        params.append((w, b))
    return params


# pure-JAX reference with the same bf16-matmul / f32-accumulate recipe
def reference_forward(x_cat, x_cont, params):
    x = jnp.concatenate(
        [jnp.transpose(x_cat, (0, 2, 1)), jnp.transpose(x_cont, (0, 2, 1))],
        axis=-1).astype(jnp.float32)

    def dense(h, w, b):
        return jnp.einsum('...k,nk->...n', h.astype(jnp.bfloat16),
                          w.astype(jnp.bfloat16),
                          preferred_element_type=jnp.float32) + b[0]

    (w1, b1), (w2, b2), (w3, b3), (w4, b4), (w5, b5), (wo, bo), \
        (wti, bti), (wto, bto) = params
    h = jax.nn.relu(dense(x, w1, b1))
    h = jax.nn.relu(dense(h, w2, b2))
    h = jax.nn.relu(dense(h, w3, b3))
    h = jax.nn.relu(dense(h, w4, b4))
    h = jax.nn.relu(dense(h, w5, b5))
    h = dense(h, wo, bo)                               # [B, T_in, 1]
    t = jnp.transpose(h, (0, 2, 1))                    # [B, 1, T_in]
    t = jax.nn.relu(dense(t, wti, bti))                # [B, 1, 128]
    return dense(t, wto, bto)                          # [B, 1, T_out]


if __name__ == "__main__":
    B, n_cat, n_cont, T_in, T_out = 16, 3, 5, 10, 10
    n_input = n_cat + n_cont

    key = jax.random.PRNGKey(0)
    k_cat, k_cont, k_params = jax.random.split(key, 3)
    x_cat = jax.random.normal(k_cat, (B, n_cat, T_in), jnp.float32)
    x_cont = jax.random.normal(k_cont, (B, n_cont, T_in), jnp.float32)
    params = init_params(k_params, n_input, T_in, T_out)

    out = mlp_model_time_series_numerical(x_cat, x_cont, params, T_in, T_out)
    out = jax.block_until_ready(out)

    ref = reference_forward(x_cat, x_cont, params)
    assert out.shape == (B, 1, T_out), out.shape
    max_err = float(jnp.max(jnp.abs(out - ref)))
    assert max_err < 5e-2, max_err

    print("KERNEL_OK")
</pallas_src>

<mosaic_0001>
module attributes {stable_mosaic.version = 11 : i64} {
  func.func @_fused_kernel(%arg0: i32, %arg1: memref<160x8xbf16, #tpu.memory_space<vmem>>, %arg2: memref<8x32xbf16, #tpu.memory_space<vmem>>, %arg3: memref<1x32xf32, #tpu.memory_space<vmem>>, %arg4: memref<32x128xbf16, #tpu.memory_space<vmem>>, %arg5: memref<1x128xf32, #tpu.memory_space<vmem>>, %arg6: memref<128x512xbf16, #tpu.memory_space<vmem>>, %arg7: memref<1x512xf32, #tpu.memory_space<vmem>>, %arg8: memref<512x128xbf16, #tpu.memory_space<vmem>>, %arg9: memref<1x128xf32, #tpu.memory_space<vmem>>, %arg10: memref<128x32xbf16, #tpu.memory_space<vmem>>, %arg11: memref<1x32xf32, #tpu.memory_space<vmem>>, %arg12: memref<32x10xbf16, #tpu.memory_space<vmem>>, %arg13: memref<1x10xf32, #tpu.memory_space<vmem>>, %arg14: memref<160x10xf32, #tpu.memory_space<vmem>>, %arg15: memref<16x160xbf16, #tpu.memory_space<vmem>>, %arg16: memref<10x128xbf16, #tpu.memory_space<vmem>>, %arg17: memref<1x128xf32, #tpu.memory_space<vmem>>, %arg18: memref<128x10xbf16, #tpu.memory_space<vmem>>, %arg19: memref<1x10xf32, #tpu.memory_space<vmem>>, %arg20: memref<16x10xf32, #tpu.memory_space<vmem>>) attributes {dimension_semantics = [#tpu.dimension_semantics<parallel>], iteration_bounds = array<i64: 1>, scalar_prefetch = 0 : i64, scratch_operands = 0 : i64, tpu.core_type = #tpu.core_type<tc>, window_params = [{transform_indices = @transform_0, window_bounds = array<i64: 160, 8>}, {pipeline_mode = #tpu.pipeline_mode<synchronous>, transform_indices = @transform_1, window_bounds = array<i64: 8, 32>}, {pipeline_mode = #tpu.pipeline_mode<synchronous>, transform_indices = @transform_2, window_bounds = array<i64: 1, 32>}, {pipeline_mode = #tpu.pipeline_mode<synchronous>, transform_indices = @transform_3, window_bounds = array<i64: 32, 128>}, {pipeline_mode = #tpu.pipeline_mode<synchronous>, transform_indices = @transform_4, window_bounds = array<i64: 1, 128>}, {pipeline_mode = #tpu.pipeline_mode<synchronous>, transform_indices = @transform_5, window_bounds = array<i64: 128, 512>}, {pipeline_mode = #tpu.pipeline_mode<synchronous>, transform_indices = @transform_6, window_bounds = array<i64: 1, 512>}, {pipeline_mode = #tpu.pipeline_mode<synchronous>, transform_indices = @transform_7, window_bounds = array<i64: 512, 128>}, {pipeline_mode = #tpu.pipeline_mode<synchronous>, transform_indices = @transform_8, window_bounds = array<i64: 1, 128>}, {pipeline_mode = #tpu.pipeline_mode<synchronous>, transform_indices = @transform_9, window_bounds = array<i64: 128, 32>}, {pipeline_mode = #tpu.pipeline_mode<synchronous>, transform_indices = @transform_10, window_bounds = array<i64: 1, 32>}, {pipeline_mode = #tpu.pipeline_mode<synchronous>, transform_indices = @transform_11, window_bounds = array<i64: 32, 10>}, {pipeline_mode = #tpu.pipeline_mode<synchronous>, transform_indices = @transform_12, window_bounds = array<i64: 1, 10>}, {pipeline_mode = #tpu.pipeline_mode<synchronous>, transform_indices = @transform_13, window_bounds = array<i64: 160, 10>}, {pipeline_mode = #tpu.pipeline_mode<synchronous>, transform_indices = @transform_14, window_bounds = array<i64: 16, 160>}, {pipeline_mode = #tpu.pipeline_mode<synchronous>, transform_indices = @transform_15, window_bounds = array<i64: 10, 128>}, {pipeline_mode = #tpu.pipeline_mode<synchronous>, transform_indices = @transform_16, window_bounds = array<i64: 1, 128>}, {pipeline_mode = #tpu.pipeline_mode<synchronous>, transform_indices = @transform_17, window_bounds = array<i64: 128, 10>}, {pipeline_mode = #tpu.pipeline_mode<synchronous>, transform_indices = @transform_18, window_bounds = array<i64: 1, 10>}, {transform_indices = @transform_19, window_bounds = array<i64: 16, 10>}]} {
    %c0 = arith.constant 0 : index
    %c0_0 = arith.constant 0 : index
    %0 = vector.load %arg1[%c0, %c0_0] : memref<160x8xbf16, #tpu.memory_space<vmem>>, vector<160x8xbf16>
    %c0_1 = arith.constant 0 : index
    %c0_2 = arith.constant 0 : index
    %1 = vector.load %arg2[%c0_1, %c0_2] : memref<8x32xbf16, #tpu.memory_space<vmem>>, vector<8x32xbf16>
    %cst = arith.constant dense<0.000000e+00> : vector<160x32xf32>
    %2 = tpu.matmul %0, %1, %cst {dimension_numbers = #tpu.dot_dimension_numbers<[1], [0], [0], [1], [0, 0, 1, 1], [], []>} : vector<160x8xbf16>, vector<8x32xbf16>, vector<160x32xf32> -> vector<160x32xf32>
    %c0_3 = arith.constant 0 : index
    %c0_4 = arith.constant 0 : index
    %3 = vector.load %arg3[%c0_3, %c0_4] : memref<1x32xf32, #tpu.memory_space<vmem>>, vector<1x32xf32>
    %4 = vector.broadcast %3 : vector<1x32xf32> to vector<160x32xf32>
    %5 = arith.addf %2, %4 : vector<160x32xf32>
    %cst_5 = arith.constant 0.000000e+00 : f32
    %6 = vector.broadcast %cst_5 : f32 to vector<160x32xf32>
    %7 = arith.maximumf %5, %6 : vector<160x32xf32>
    %8 = arith.truncf %7 : vector<160x32xf32> to vector<160x32xbf16>
    %c0_6 = arith.constant 0 : index
    %c0_7 = arith.constant 0 : index
    %9 = vector.load %arg4[%c0_6, %c0_7] : memref<32x128xbf16, #tpu.memory_space<vmem>>, vector<32x128xbf16>
    %cst_8 = arith.constant dense<0.000000e+00> : vector<160x128xf32>
    %10 = tpu.matmul %8, %9, %cst_8 {dimension_numbers = #tpu.dot_dimension_numbers<[1], [0], [0], [1], [0, 0, 1, 1], [], []>} : vector<160x32xbf16>, vector<32x128xbf16>, vector<160x128xf32> -> vector<160x128xf32>
    %c0_9 = arith.constant 0 : index
    %c0_10 = arith.constant 0 : index
    %11 = vector.load %arg5[%c0_9, %c0_10] : memref<1x128xf32, #tpu.memory_space<vmem>>, vector<1x128xf32>
    %12 = vector.broadcast %11 : vector<1x128xf32> to vector<160x128xf32>
    %13 = arith.addf %10, %12 : vector<160x128xf32>
    %cst_11 = arith.constant 0.000000e+00 : f32
    %14 = vector.broadcast %cst_11 : f32 to vector<160x128xf32>
    %15 = arith.maximumf %13, %14 : vector<160x128xf32>
    %16 = arith.truncf %15 : vector<160x128xf32> to vector<160x128xbf16>
    %c0_12 = arith.constant 0 : index
    %c0_13 = arith.constant 0 : index
    %17 = vector.load %arg6[%c0_12, %c0_13] : memref<128x512xbf16, #tpu.memory_space<vmem>>, vector<128x512xbf16>
    %cst_14 = arith.constant dense<0.000000e+00> : vector<160x512xf32>
    %18 = tpu.matmul %16, %17, %cst_14 {dimension_numbers = #tpu.dot_dimension_numbers<[1], [0], [0], [1], [0, 0, 1, 1], [], []>} : vector<160x128xbf16>, vector<128x512xbf16>, vector<160x512xf32> -> vector<160x512xf32>
    %c0_15 = arith.constant 0 : index
    %c0_16 = arith.constant 0 : index
    %19 = vector.load %arg7[%c0_15, %c0_16] : memref<1x512xf32, #tpu.memory_space<vmem>>, vector<1x512xf32>
    %20 = vector.broadcast %19 : vector<1x512xf32> to vector<160x512xf32>
    %21 = arith.addf %18, %20 : vector<160x512xf32>
    %cst_17 = arith.constant 0.000000e+00 : f32
    %22 = vector.broadcast %cst_17 : f32 to vector<160x512xf32>
    %23 = arith.maximumf %21, %22 : vector<160x512xf32>
    %24 = arith.truncf %23 : vector<160x512xf32> to vector<160x512xbf16>
    %c0_18 = arith.constant 0 : index
    %c0_19 = arith.constant 0 : index
    %25 = vector.load %arg8[%c0_18, %c0_19] : memref<512x128xbf16, #tpu.memory_space<vmem>>, vector<512x128xbf16>
    %cst_20 = arith.constant dense<0.000000e+00> : vector<160x128xf32>
    %26 = tpu.matmul %24, %25, %cst_20 {dimension_numbers = #tpu.dot_dimension_numbers<[1], [0], [0], [1], [0, 0, 1, 1], [], []>} : vector<160x512xbf16>, vector<512x128xbf16>, vector<160x128xf32> -> vector<160x128xf32>
    %c0_21 = arith.constant 0 : index
    %c0_22 = arith.constant 0 : index
    %27 = vector.load %arg9[%c0_21, %c0_22] : memref<1x128xf32, #tpu.memory_space<vmem>>, vector<1x128xf32>
    %28 = vector.broadcast %27 : vector<1x128xf32> to vector<160x128xf32>
    %29 = arith.addf %26, %28 : vector<160x128xf32>
    %cst_23 = arith.constant 0.000000e+00 : f32
    %30 = vector.broadcast %cst_23 : f32 to vector<160x128xf32>
    %31 = arith.maximumf %29, %30 : vector<160x128xf32>
    %32 = arith.truncf %31 : vector<160x128xf32> to vector<160x128xbf16>
    %c0_24 = arith.constant 0 : index
    %c0_25 = arith.constant 0 : index
    %33 = vector.load %arg10[%c0_24, %c0_25] : memref<128x32xbf16, #tpu.memory_space<vmem>>, vector<128x32xbf16>
    %cst_26 = arith.constant dense<0.000000e+00> : vector<160x32xf32>
    %34 = tpu.matmul %32, %33, %cst_26 {dimension_numbers = #tpu.dot_dimension_numbers<[1], [0], [0], [1], [0, 0, 1, 1], [], []>} : vector<160x128xbf16>, vector<128x32xbf16>, vector<160x32xf32> -> vector<160x32xf32>
    %c0_27 = arith.constant 0 : index
    %c0_28 = arith.constant 0 : index
    %35 = vector.load %arg11[%c0_27, %c0_28] : memref<1x32xf32, #tpu.memory_space<vmem>>, vector<1x32xf32>
    %36 = vector.broadcast %35 : vector<1x32xf32> to vector<160x32xf32>
    %37 = arith.addf %34, %36 : vector<160x32xf32>
    %cst_29 = arith.constant 0.000000e+00 : f32
    %38 = vector.broadcast %cst_29 : f32 to vector<160x32xf32>
    %39 = arith.maximumf %37, %38 : vector<160x32xf32>
    %40 = arith.truncf %39 : vector<160x32xf32> to vector<160x32xbf16>
    %c0_30 = arith.constant 0 : index
    %c0_31 = arith.constant 0 : index
    %41 = vector.load %arg12[%c0_30, %c0_31] : memref<32x10xbf16, #tpu.memory_space<vmem>>, vector<32x10xbf16>
    %cst_32 = arith.constant dense<0.000000e+00> : vector<160x10xf32>
    %42 = tpu.matmul %40, %41, %cst_32 {dimension_numbers = #tpu.dot_dimension_numbers<[1], [0], [0], [1], [0, 0, 1, 1], [], []>} : vector<160x32xbf16>, vector<32x10xbf16>, vector<160x10xf32> -> vector<160x10xf32>
    %c0_33 = arith.constant 0 : index
    %c0_34 = arith.constant 0 : index
    %43 = vector.load %arg13[%c0_33, %c0_34] : memref<1x10xf32, #tpu.memory_space<vmem>>, vector<1x10xf32>
    %44 = vector.broadcast %43 : vector<1x10xf32> to vector<160x10xf32>
    %45 = arith.addf %42, %44 : vector<160x10xf32>
    %c0_35 = arith.constant 0 : index
    %c0_36 = arith.constant 0 : index
    %46 = vector.load %arg14[%c0_35, %c0_36] : memref<160x10xf32, #tpu.memory_space<vmem>>, vector<160x10xf32>
    %47 = arith.mulf %45, %46 : vector<160x10xf32>
    %48 = arith.truncf %47 : vector<160x10xf32> to vector<160x10xbf16>
    %c0_37 = arith.constant 0 : index
    %c0_38 = arith.constant 0 : index
    %49 = vector.load %arg15[%c0_37, %c0_38] : memref<16x160xbf16, #tpu.memory_space<vmem>>, vector<16x160xbf16>
    %cst_39 = arith.constant dense<0.000000e+00> : vector<16x10xf32>
    %50 = tpu.matmul %49, %48, %cst_39 {dimension_numbers = #tpu.dot_dimension_numbers<[1], [0], [0], [1], [0, 0, 1, 1], [], []>} : vector<16x160xbf16>, vector<160x10xbf16>, vector<16x10xf32> -> vector<16x10xf32>
    %51 = arith.truncf %50 : vector<16x10xf32> to vector<16x10xbf16>
    %c0_40 = arith.constant 0 : index
    %c0_41 = arith.constant 0 : index
    %52 = vector.load %arg16[%c0_40, %c0_41] : memref<10x128xbf16, #tpu.memory_space<vmem>>, vector<10x128xbf16>
    %cst_42 = arith.constant dense<0.000000e+00> : vector<16x128xf32>
    %53 = tpu.matmul %51, %52, %cst_42 {dimension_numbers = #tpu.dot_dimension_numbers<[1], [0], [0], [1], [0, 0, 1, 1], [], []>} : vector<16x10xbf16>, vector<10x128xbf16>, vector<16x128xf32> -> vector<16x128xf32>
    %c0_43 = arith.constant 0 : index
    %c0_44 = arith.constant 0 : index
    %54 = vector.load %arg17[%c0_43, %c0_44] : memref<1x128xf32, #tpu.memory_space<vmem>>, vector<1x128xf32>
    %55 = vector.broadcast %54 : vector<1x128xf32> to vector<16x128xf32>
    %56 = arith.addf %53, %55 : vector<16x128xf32>
    %cst_45 = arith.constant 0.000000e+00 : f32
    %57 = vector.broadcast %cst_45 : f32 to vector<16x128xf32>
    %58 = arith.maximumf %56, %57 : vector<16x128xf32>
    %59 = arith.truncf %58 : vector<16x128xf32> to vector<16x128xbf16>
    %c0_46 = arith.constant 0 : index
    %c0_47 = arith.constant 0 : index
    %60 = vector.load %arg18[%c0_46, %c0_47] : memref<128x10xbf16, #tpu.memory_space<vmem>>, vector<128x10xbf16>
    %cst_48 = arith.constant dense<0.000000e+00> : vector<16x10xf32>
    %61 = tpu.matmul %59, %60, %cst_48 {dimension_numbers = #tpu.dot_dimension_numbers<[1], [0], [0], [1], [0, 0, 1, 1], [], []>} : vector<16x128xbf16>, vector<128x10xbf16>, vector<16x10xf32> -> vector<16x10xf32>
    %c0_49 = arith.constant 0 : index
    %c0_50 = arith.constant 0 : index
    %62 = vector.load %arg19[%c0_49, %c0_50] : memref<1x10xf32, #tpu.memory_space<vmem>>, vector<1x10xf32>
    %63 = vector.broadcast %62 : vector<1x10xf32> to vector<16x10xf32>
    %64 = arith.addf %61, %63 : vector<16x10xf32>
    %c0_51 = arith.constant 0 : index
    %c0_52 = arith.constant 0 : index
    %65 = vector.load %arg20[%c0_51, %c0_52] : memref<16x10xf32, #tpu.memory_space<vmem>>, vector<16x10xf32>
    tpu.vector_store %arg20[%c0_51, %c0_52], %64 {strides = array<i32>} : memref<16x10xf32, #tpu.memory_space<vmem>>, vector<16x10xf32>,
    return
  }
  func.func @transform_0(%arg0: i32) -> (i32, i32) {
    %c0_i32 = arith.constant 0 : i32
    %c0_i32_0 = arith.constant 0 : i32
    return %arg0, %c0_i32 : i32, i32
  }
  func.func @transform_1(%arg0: i32) -> (i32, i32) {
    %c0_i32 = arith.constant 0 : i32
    %c0_i32_0 = arith.constant 0 : i32
    %c0_i32_1 = arith.constant 0 : i32
    return %c0_i32, %c0_i32_0 : i32, i32
  }
  func.func @transform_2(%arg0: i32) -> (i32, i32) {
    %c0_i32 = arith.constant 0 : i32
    %c0_i32_0 = arith.constant 0 : i32
    %c0_i32_1 = arith.constant 0 : i32
    return %c0_i32, %c0_i32_0 : i32, i32
  }
  func.func @transform_3(%arg0: i32) -> (i32, i32) {
    %c0_i32 = arith.constant 0 : i32
    %c0_i32_0 = arith.constant 0 : i32
    %c0_i32_1 = arith.constant 0 : i32
    return %c0_i32, %c0_i32_0 : i32, i32
  }
  func.func @transform_4(%arg0: i32) -> (i32, i32) {
    %c0_i32 = arith.constant 0 : i32
    %c0_i32_0 = arith.constant 0 : i32
    %c0_i32_1 = arith.constant 0 : i32
    return %c0_i32, %c0_i32_0 : i32, i32
  }
  func.func @transform_5(%arg0: i32) -> (i32, i32) {
    %c0_i32 = arith.constant 0 : i32
    %c0_i32_0 = arith.constant 0 : i32
    %c0_i32_1 = arith.constant 0 : i32
    return %c0_i32, %c0_i32_0 : i32, i32
  }
  func.func @transform_6(%arg0: i32) -> (i32, i32) {
    %c0_i32 = arith.constant 0 : i32
    %c0_i32_0 = arith.constant 0 : i32
    %c0_i32_1 = arith.constant 0 : i32
    return %c0_i32, %c0_i32_0 : i32, i32
  }
  func.func @transform_7(%arg0: i32) -> (i32, i32) {
    %c0_i32 = arith.constant 0 : i32
    %c0_i32_0 = arith.constant 0 : i32
    %c0_i32_1 = arith.constant 0 : i32
    return %c0_i32, %c0_i32_0 : i32, i32
  }
  func.func @transform_8(%arg0: i32) -> (i32, i32) {
    %c0_i32 = arith.constant 0 : i32
    %c0_i32_0 = arith.constant 0 : i32
    %c0_i32_1 = arith.constant 0 : i32
    return %c0_i32, %c0_i32_0 : i32, i32
  }
  func.func @transform_9(%arg0: i32) -> (i32, i32) {
    %c0_i32 = arith.constant 0 : i32
    %c0_i32_0 = arith.constant 0 : i32
    %c0_i32_1 = arith.constant 0 : i32
    return %c0_i32, %c0_i32_0 : i32, i32
  }
  func.func @transform_10(%arg0: i32) -> (i32, i32) {
    %c0_i32 = arith.constant 0 : i32
    %c0_i32_0 = arith.constant 0 : i32
    %c0_i32_1 = arith.constant 0 : i32
    return %c0_i32, %c0_i32_0 : i32, i32
  }
  func.func @transform_11(%arg0: i32) -> (i32, i32) {
    %c0_i32 = arith.constant 0 : i32
    %c0_i32_0 = arith.constant 0 : i32
    %c0_i32_1 = arith.constant 0 : i32
    return %c0_i32, %c0_i32_0 : i32, i32
  }
  func.func @transform_12(%arg0: i32) -> (i32, i32) {
    %c0_i32 = arith.constant 0 : i32
    %c0_i32_0 = arith.constant 0 : i32
    %c0_i32_1 = arith.constant 0 : i32
    return %c0_i32, %c0_i32_0 : i32, i32
  }
  func.func @transform_13(%arg0: i32) -> (i32, i32) {
    %c0_i32 = arith.constant 0 : i32
    %c0_i32_0 = arith.constant 0 : i32
    %c0_i32_1 = arith.constant 0 : i32
    return %c0_i32, %c0_i32_0 : i32, i32
  }
  func.func @transform_14(%arg0: i32) -> (i32, i32) {
    %c0_i32 = arith.constant 0 : i32
    %c0_i32_0 = arith.constant 0 : i32
    %c0_i32_1 = arith.constant 0 : i32
    return %c0_i32, %c0_i32_0 : i32, i32
  }
  func.func @transform_15(%arg0: i32) -> (i32, i32) {
    %c0_i32 = arith.constant 0 : i32
    %c0_i32_0 = arith.constant 0 : i32
    %c0_i32_1 = arith.constant 0 : i32
    return %c0_i32, %c0_i32_0 : i32, i32
  }
  func.func @transform_16(%arg0: i32) -> (i32, i32) {
    %c0_i32 = arith.constant 0 : i32
    %c0_i32_0 = arith.constant 0 : i32
    %c0_i32_1 = arith.constant 0 : i32
    return %c0_i32, %c0_i32_0 : i32, i32
  }
  func.func @transform_17(%arg0: i32) -> (i32, i32) {
    %c0_i32 = arith.constant 0 : i32
    %c0_i32_0 = arith.constant 0 : i32
    %c0_i32_1 = arith.constant 0 : i32
    return %c0_i32, %c0_i32_0 : i32, i32
  }
  func.func @transform_18(%arg0: i32) -> (i32, i32) {
    %c0_i32 = arith.constant 0 : i32
    %c0_i32_0 = arith.constant 0 : i32
    %c0_i32_1 = arith.constant 0 : i32
    return %c0_i32, %c0_i32_0 : i32, i32
  }
  func.func @transform_19(%arg0: i32) -> (i32, i32) {
    %c0_i32 = arith.constant 0 : i32
    %c0_i32_0 = arith.constant 0 : i32
    return %arg0, %c0_i32 : i32, i32
  }
}

</mosaic_0001>

<llo_original>
// kernel: tpu_custom_call.1
$region0: #{tpu_custom_call.1}
  #allocation0 [shape = 'u32[]', space=smem, size = 0x4, offset = 0x4, fixed_abs, tag = 'smem constant byte address 0x4 - core index']
  #allocation1 [shape = 'u32[72,128]{1,0:T(1,128)}', space=vmem, size = 0x9000, scoped, tag = 'internal scratch']
  %s0 = inlined_call_operand.vmem [shape: bf16[160,8], index: 0, kind: input, shape index: {}]
  %s1 = inlined_call_operand.vmem [shape: bf16[8,32], index: 1, kind: input, shape index: {}]
  %s2 = inlined_call_operand.vmem [shape: f32[1,32], index: 2, kind: input, shape index: {}]
  %s3 = inlined_call_operand.vmem [shape: bf16[32,128], index: 3, kind: input, shape index: {}]
  %s4 = inlined_call_operand.vmem [shape: f32[1,128], index: 4, kind: input, shape index: {}]
  %s5 = inlined_call_operand.hbm [shape: bf16[128,512], index: 5, kind: input, shape index: {}]
  %s6 = inlined_call_operand.vmem [shape: f32[1,512], index: 6, kind: input, shape index: {}]
  %s7 = inlined_call_operand.hbm [shape: bf16[512,128], index: 7, kind: input, shape index: {}]
  %s8 = inlined_call_operand.vmem [shape: f32[1,128], index: 8, kind: input, shape index: {}]
  %s9 = inlined_call_operand.vmem [shape: bf16[128,32], index: 9, kind: input, shape index: {}]
  %s10 = inlined_call_operand.vmem [shape: f32[1,32], index: 10, kind: input, shape index: {}]
  %s11 = inlined_call_operand.vmem [shape: bf16[32,10], index: 11, kind: input, shape index: {}]
  %s12 = inlined_call_operand.vmem [shape: f32[1,10], index: 12, kind: input, shape index: {}]
  %s13 = inlined_call_operand.vmem [shape: f32[160,10], index: 13, kind: input, shape index: {}]
  %s14 = inlined_call_operand.vmem [shape: bf16[16,160], index: 14, kind: input, shape index: {}]
  %s15 = inlined_call_operand.vmem [shape: bf16[10,128], index: 15, kind: input, shape index: {}]
  %s16 = inlined_call_operand.vmem [shape: f32[1,128], index: 16, kind: input, shape index: {}]
  %s17 = inlined_call_operand.vmem [shape: bf16[128,10], index: 17, kind: input, shape index: {}]
  %s18 = inlined_call_operand.vmem [shape: f32[1,10], index: 18, kind: input, shape index: {}]
  %s19 = inlined_call_operand.hbm [shape: f32[16,10], index: 19, kind: output, shape index: {}]
  %s20 = sld [smem:[#allocation0]]
  $region94: #{tpu_custom_call.1} parent=0
    _
  %s22 = ssub.s32 1, %s20
  %s23 = scalar_select 0, %s22, %s20
  $region1: #{tpu_custom_call.1} parent=0
    #allocation2 [shape = 'u8[131072]{0}', space=vmem, size = 0x20000, scoped, tag = 'input window, operand 5, single buffered']
    #allocation3 [shape = 's32[1]{0}', space=sflag, size = 0x4, scoped, tag = 'scoped memory for tpu_custom_call.1']
    #allocation4 [shape = 's32[1]{0}', space=sflag, size = 0x4, scoped, tag = 'scoped memory for tpu_custom_call.1']
    #allocation5 [shape = 'u8[131072]{0}', space=vmem, size = 0x20000, scoped, tag = 'input window, operand 7, single buffered']
    #allocation6 [shape = 's32[1]{0}', space=sflag, size = 0x4, scoped, tag = 'scoped memory for tpu_custom_call.1']
    #allocation7 [shape = 'u8[8192]{0}', space=vmem, size = 0x2000, scoped, tag = 'output window, operand 0, single buffered']
    %24 = vsyncpa [#allocation3], 0
    %25 = vsyncpa [#allocation6], 0
    %26 = vsyncpa [#allocation4], 0
    // Predicated region
    $region2: #{tpu_custom_call.1} parent=1 // pred_check
      _
    $region3: #{tpu_custom_call.1} parent=1 // pred_check_branch
      %28 = sbr.rel (0) target = $region5
    $region4: #{tpu_custom_call.1} parent=1 // pred_region
      _
    $region5: #{tpu_custom_call.1} parent=1 // pred_fallthru
      _
    // Predicated region
    $region6: #{tpu_custom_call.1} parent=1 // pred_check
      _
    $region7: #{tpu_custom_call.1} parent=1 // pred_check_branch
      %30 = sbr.rel (0) target = $region9
    $region8: #{tpu_custom_call.1} parent=1 // pred_region
      _
    $region9: #{tpu_custom_call.1} parent=1 // pred_fallthru
      _
    // Predicated region
    $region10: #{tpu_custom_call.1} parent=1 // pred_check
      _
    $region11: #{tpu_custom_call.1} parent=1 // pred_check_branch
      %32 = sbr.rel (0) target = $region13
    $region12: #{tpu_custom_call.1} parent=1 // pred_region
      _
    $region13: #{tpu_custom_call.1} parent=1 // pred_fallthru
      _
    // Predicated region
    $region14: #{tpu_custom_call.1} parent=1 // pred_check
      _
    $region15: #{tpu_custom_call.1} parent=1 // pred_check_branch
      %34 = sbr.rel (0) target = $region17
    $region16: #{tpu_custom_call.1} parent=1 // pred_region
      _
    $region17: #{tpu_custom_call.1} parent=1 // pred_fallthru
      _
    // Predicated region
    $region18: #{tpu_custom_call.1} parent=1 // pred_check
      _
    $region19: #{tpu_custom_call.1} parent=1 // pred_check_branch
      %36 = sbr.rel (0) target = $region21
    $region20: #{tpu_custom_call.1} parent=1 // pred_region
      _
    $region21: #{tpu_custom_call.1} parent=1 // pred_fallthru
      _
    // Predicated region
    $region22: #{tpu_custom_call.1} parent=1 // pred_check
      _
    $region23: #{tpu_custom_call.1} parent=1 // pred_check_branch
      %38 = sbr.rel (0) target = $region25
    $region24: #{tpu_custom_call.1} parent=1 // pred_region
      %40 = vsyncadd [#allocation3], 0
      %s41 = sshll.u32 %s5, 4
      %s42 = int_to_ptr.hbm [resolvable:$true] %s41
      %s43 = sshll.u32 [#allocation2], 4
      %s44 = int_to_ptr.vmem [resolvable:$true] %s43
      %49 = dma.hbm_to_vmem [thread:$0]  %s42, 4096, %s44, [#allocation3], 256, 256, 16
    $region25: #{tpu_custom_call.1} parent=1 // pred_fallthru
      _
    // Predicated region
    $region26: #{tpu_custom_call.1} parent=1 // pred_check
      _
    $region27: #{tpu_custom_call.1} parent=1 // pred_check_branch
      %51 = sbr.rel (0) target = $region29
    $region28: #{tpu_custom_call.1} parent=1 // pred_region
      _
    $region29: #{tpu_custom_call.1} parent=1 // pred_fallthru
      _
    // Predicated region
    $region30: #{tpu_custom_call.1} parent=1 // pred_check
      _
    $region31: #{tpu_custom_call.1} parent=1 // pred_check_branch
      %53 = sbr.rel (0) target = $region33
    $region32: #{tpu_custom_call.1} parent=1 // pred_region
      %55 = vsyncadd [#allocation6], 0
      %s56 = sshll.u32 %s7, 4
      %s57 = int_to_ptr.hbm [resolvable:$true] %s56
      %s58 = sshll.u32 [#allocation5], 4
      %s59 = int_to_ptr.vmem [resolvable:$true] %s58
      %64 = dma.hbm_to_vmem [thread:$0]  %s57, 4096, %s59, [#allocation6], 64, 64, 4
    $region33: #{tpu_custom_call.1} parent=1 // pred_fallthru
      _
    // Predicated region
    $region34: #{tpu_custom_call.1} parent=1 // pred_check
      _
    $region35: #{tpu_custom_call.1} parent=1 // pred_check_branch
      %66 = sbr.rel (0) target = $region37
    $region36: #{tpu_custom_call.1} parent=1 // pred_region
      _
    $region37: #{tpu_custom_call.1} parent=1 // pred_fallthru
      _
    // Predicated region
    $region38: #{tpu_custom_call.1} parent=1 // pred_check
      _
    $region39: #{tpu_custom_call.1} parent=1 // pred_check_branch
      %68 = sbr.rel (0) target = $region41
    $region40: #{tpu_custom_call.1} parent=1 // pred_region
      _
    $region41: #{tpu_custom_call.1} parent=1 // pred_fallthru
      _
    // Predicated region
    $region42: #{tpu_custom_call.1} parent=1 // pred_check
      _
    $region43: #{tpu_custom_call.1} parent=1 // pred_check_branch
      %70 = sbr.rel (0) target = $region45
    $region44: #{tpu_custom_call.1} parent=1 // pred_region
      _
    $region45: #{tpu_custom_call.1} parent=1 // pred_fallthru
      _
    // Predicated region
    $region46: #{tpu_custom_call.1} parent=1 // pred_check
      _
    $region47: #{tpu_custom_call.1} parent=1 // pred_check_branch
      %72 = sbr.rel (0) target = $region49
    $region48: #{tpu_custom_call.1} parent=1 // pred_region
      _
    $region49: #{tpu_custom_call.1} parent=1 // pred_fallthru
      _
    // Predicated region
    $region50: #{tpu_custom_call.1} parent=1 // pred_check
      _
    $region51: #{tpu_custom_call.1} parent=1 // pred_check_branch
      %74 = sbr.rel (0) target = $region53
    $region52: #{tpu_custom_call.1} parent=1 // pred_region
      _
    $region53: #{tpu_custom_call.1} parent=1 // pred_fallthru
      _
    // Predicated region
    $region54: #{tpu_custom_call.1} parent=1 // pred_check
      _
    $region55: #{tpu_custom_call.1} parent=1 // pred_check_branch
      %76 = sbr.rel (0) target = $region57
    $region56: #{tpu_custom_call.1} parent=1 // pred_region
      _
    $region57: #{tpu_custom_call.1} parent=1 // pred_fallthru
      _
    // Predicated region
    $region58: #{tpu_custom_call.1} parent=1 // pred_check
      _
    $region59: #{tpu_custom_call.1} parent=1 // pred_check_branch
      %78 = sbr.rel (0) target = $region61
    $region60: #{tpu_custom_call.1} parent=1 // pred_region
      _
    $region61: #{tpu_custom_call.1} parent=1 // pred_fallthru
      _
    // Predicated region
    $region62: #{tpu_custom_call.1} parent=1 // pred_check
      _
    $region63: #{tpu_custom_call.1} parent=1 // pred_check_branch
      %80 = sbr.rel (0) target = $region65
    $region64: #{tpu_custom_call.1} parent=1 // pred_region
      _
    $region65: #{tpu_custom_call.1} parent=1 // pred_fallthru
      _
    // Predicated region
    $region66: #{tpu_custom_call.1} parent=1 // pred_check
      _
    $region67: #{tpu_custom_call.1} parent=1 // pred_check_branch
      %82 = sbr.rel (0) target = $region69
    $region68: #{tpu_custom_call.1} parent=1 // pred_region
      _
    $region69: #{tpu_custom_call.1} parent=1 // pred_fallthru
      _
    // Predicated region
    $region70: #{tpu_custom_call.1} parent=1 // pred_check
      _
    $region71: #{tpu_custom_call.1} parent=1 // pred_check_branch
      %84 = sbr.rel (0) target = $region73
    $region72: #{tpu_custom_call.1} parent=1 // pred_region
      _
    $region73: #{tpu_custom_call.1} parent=1 // pred_fallthru
      _
    // Predicated region
    $region74: #{tpu_custom_call.1} parent=1 // pred_check
      _
    $region75: #{tpu_custom_call.1} parent=1 // pred_check_branch
      %86 = sbr.rel (0) target = $region77
    $region76: #{tpu_custom_call.1} parent=1 // pred_region
      _
    $region77: #{tpu_custom_call.1} parent=1 // pred_fallthru
      _
    // Predicated region
    $region78: #{tpu_custom_call.1} parent=1 // pred_check
      _
    $region79: #{tpu_custom_call.1} parent=1 // pred_check_branch
      %88 = sbr.rel (0) target = $region81
    $region80: #{tpu_custom_call.1} parent=1 // pred_region
      %90 = dma.done [#allocation3], 4096
    $region81: #{tpu_custom_call.1} parent=1 // pred_fallthru
      _
    // Predicated region
    $region82: #{tpu_custom_call.1} parent=1 // pred_check
      _
    $region83: #{tpu_custom_call.1} parent=1 // pred_check_branch
      %92 = sbr.rel (0) target = $region85
    $region84: #{tpu_custom_call.1} parent=1 // pred_region
      %94 = dma.done [#allocation6], 4096
    $region85: #{tpu_custom_call.1} parent=1 // pred_fallthru
      _
    %v96 = vld [vmem:[%s0] sm:$0xf]
    %v97 = vld [vmem:[%s0 + $0x4] sm:$0xf]
    %v98 = vld [vmem:[%s0 + $0x8] sm:$0xf]
    %v99 = vld [vmem:[%s0 + $0xc] sm:$0xf]
    %v100 = vld [vmem:[%s0 + $0x10] sm:$0xf]
    %v101 = vld [vmem:[%s0 + $0x14] sm:$0xf]
    %v102 = vld [vmem:[%s0 + $0x18] sm:$0xf]
    %v103 = vld [vmem:[%s0 + $0x1c] sm:$0xf]
    %v104 = vld [vmem:[%s0 + $0x20] sm:$0xf]
    %v105 = vld [vmem:[%s0 + $0x24] sm:$0xf]
    %v106 = vld [vmem:[%s0 + $0x28] sm:$0xf]
    %v107 = vld [vmem:[%s0 + $0x2c] sm:$0xf]
    %v108 = vld [vmem:[%s0 + $0x30] sm:$0xf]
    %v109 = vld [vmem:[%s0 + $0x34] sm:$0xf]
    %v110 = vld [vmem:[%s0 + $0x38] sm:$0xf]
    %v111 = vld [vmem:[%s0 + $0x3c] sm:$0xf]
    %v112 = vld [vmem:[%s0 + $0x40] sm:$0xf]
    %v113 = vld [vmem:[%s0 + $0x44] sm:$0xf]
    %v114 = vld [vmem:[%s0 + $0x48] sm:$0xf]
    %v115 = vld [vmem:[%s0 + $0x4c] sm:$0xf]
    %v116 = vld [vmem:[%s1] sm:$0xf]
    %v117 = vld [vmem:[%s2] sm:$0x1]
    %v119 = vperm.slane %v117, 0
    %v141 = vunpack.c.l.b16 %v96
    %v142 = vunpack.c.l.b16 %v97
    %v143 = vunpack.c.l.b16 %v98
    %v144 = vunpack.c.l.b16 %v99
    %v145 = vunpack.c.l.b16 %v100
    %v146 = vunpack.c.l.b16 %v101
    %v147 = vunpack.c.l.b16 %v102
    %v148 = vunpack.c.l.b16 %v103
    %v149 = vunpack.c.l.b16 %v104
    %v150 = vunpack.c.l.b16 %v105
    %v151 = vunpack.c.l.b16 %v106
    %v152 = vunpack.c.l.b16 %v107
    %v153 = vunpack.c.l.b16 %v108
    %v154 = vunpack.c.l.b16 %v109
    %v155 = vunpack.c.l.b16 %v110
    %v156 = vunpack.c.l.b16 %v111
    %v157 = vunpack.c.l.b16 %v112
    %v158 = vunpack.c.l.b16 %v113
    %v159 = vunpack.c.l.b16 %v114
    %v160 = vunpack.c.l.b16 %v115
    %v161 = vpack.c.b16 %v142, %v141
    %v162 = vpack.c.b16 %v144, %v143
    %v163 = vpack.c.b16 %v146, %v145
    %v164 = vpack.c.b16 %v148, %v147
    %v165 = vpack.c.b16 %v150, %v149
    %v166 = vpack.c.b16 %v152, %v151
    %v167 = vpack.c.b16 %v154, %v153
    %v168 = vpack.c.b16 %v156, %v155
    %v169 = vpack.c.b16 %v158, %v157
    %v170 = vpack.c.b16 %v160, %v159
    %vm171 = vcmask 64512
    %v173 = vsel %vm171, %v161, 0
    %v176 = vsel %vm171, %v162, 0
    %v179 = vsel %vm171, %v163, 0
    %v182 = vsel %vm171, %v164, 0
    %v185 = vsel %vm171, %v165, 0
    %v188 = vsel %vm171, %v166, 0
    %v191 = vsel %vm171, %v167, 0
    %v194 = vsel %vm171, %v168, 0
    %v197 = vsel %vm171, %v169, 0
    %v200 = vsel %vm171, %v170, 0
    %vm202 = vcmask 1043456
    %v204 = vsel %vm202, %v116, 0
    %206 = vmatpush.bf16.msra.mxu0 0
    %207 = vmatpush.bf16.msra.mxu0 0
    %208 = vmatpush.bf16.msra.mxu0 0
    %209 = vmatpush.bf16.msra.mxu0 0
    %210 = vmatpush.bf16.msra.mxu0 0
    %211 = vmatpush.bf16.msra.mxu0 0
    %212 = vmatpush.bf16.msra.mxu0 0
    %213 = vmatpush.bf16.msra.mxu0 %v204
    %214 = vmatmul.bf16.gmra.mxu0 %v173
    %v215 = vpop.f32.mrf.mxu0
    %v216 = vadd.f32 %v119, %v215
    %v217 = vpop.f32.mrf.mxu0
    %v218 = vadd.f32 %v119, %v217
    %219 = vmatmul.bf16.gmra.mxu0 %v176
    %v220 = vpop.f32.mrf.mxu0
    %v221 = vadd.f32 %v119, %v220
    %v222 = vpop.f32.mrf.mxu0
    %v223 = vadd.f32 %v119, %v222
    %224 = vmatmul.bf16.gmra.mxu0 %v179
    %v225 = vpop.f32.mrf.mxu0
    %v226 = vadd.f32 %v119, %v225
    %v227 = vpop.f32.mrf.mxu0
    %v228 = vadd.f32 %v119, %v227
    %229 = vmatmul.bf16.gmra.mxu0 %v182
    %v230 = vpop.f32.mrf.mxu0
    %v231 = vadd.f32 %v119, %v230
    %v232 = vpop.f32.mrf.mxu0
    %v233 = vadd.f32 %v119, %v232
    %234 = vmatmul.bf16.gmra.mxu0 %v185
    %v235 = vpop.f32.mrf.mxu0
    %v236 = vadd.f32 %v119, %v235
    %v237 = vpop.f32.mrf.mxu0
    %v238 = vadd.f32 %v119, %v237
    %239 = vmatmul.bf16.gmra.mxu0 %v188
    %v240 = vpop.f32.mrf.mxu0
    %v241 = vadd.f32 %v119, %v240
    %v242 = vpop.f32.mrf.mxu0
    %v243 = vadd.f32 %v119, %v242
    %244 = vmatmul.bf16.gmra.mxu0 %v191
    %v245 = vpop.f32.mrf.mxu0
    %v246 = vadd.f32 %v119, %v245
    %v247 = vpop.f32.mrf.mxu0
    %v248 = vadd.f32 %v119, %v247
    %249 = vmatmul.bf16.gmra.mxu0 %v194
    %v250 = vpop.f32.mrf.mxu0
    %v251 = vadd.f32 %v119, %v250
    %v252 = vpop.f32.mrf.mxu0
    %v253 = vadd.f32 %v119, %v252
    %254 = vmatmul.bf16.gmra.mxu0 %v197
    %v255 = vpop.f32.mrf.mxu0
    %v256 = vadd.f32 %v119, %v255
    %v257 = vpop.f32.mrf.mxu0
    %v258 = vadd.f32 %v119, %v257
    %259 = vmatmul.bf16.gmra.mxu0 %v200
    %v260 = vpop.f32.mrf.mxu0
    %v261 = vadd.f32 %v119, %v260
    %v262 = vpop.f32.mrf.mxu0
    %v263 = vadd.f32 %v119, %v262
    %264 = vdwg.mxu0
    %v265 = vmax.f32 %v216, 0.0
    %v266 = vmax.f32 %v218, 0.0
    %v267 = vmax.f32 %v221, 0.0
    %v268 = vmax.f32 %v223, 0.0
    %v269 = vmax.f32 %v226, 0.0
    %v270 = vmax.f32 %v228, 0.0
    %v271 = vmax.f32 %v231, 0.0
    %v272 = vmax.f32 %v233, 0.0
    %v273 = vmax.f32 %v236, 0.0
    %v274 = vmax.f32 %v238, 0.0
    %v275 = vmax.f32 %v241, 0.0
    %v276 = vmax.f32 %v243, 0.0
    %v277 = vmax.f32 %v246, 0.0
    %v278 = vmax.f32 %v248, 0.0
    %v279 = vmax.f32 %v251, 0.0
    %v280 = vmax.f32 %v253, 0.0
    %v281 = vmax.f32 %v256, 0.0
    %v282 = vmax.f32 %v258, 0.0
    %v283 = vmax.f32 %v261, 0.0
    %v284 = vmax.f32 %v263, 0.0
    %v285 = vpack.c.bf16 %v266, %v265
    %v286 = vpack.c.bf16 %v268, %v267
    %v287 = vpack.c.bf16 %v270, %v269
    %v288 = vpack.c.bf16 %v272, %v271
    %v289 = vpack.c.bf16 %v274, %v273
    %v290 = vpack.c.bf16 %v276, %v275
    %v291 = vpack.c.bf16 %v278, %v277
    %v292 = vpack.c.bf16 %v280, %v279
    %v293 = vpack.c.bf16 %v282, %v281
    %v294 = vpack.c.bf16 %v284, %v283
    %v295 = vld [vmem:[%s3] sm:$0xf]
    %v296 = vld [vmem:[%s3 + $0x4] sm:$0xf]
    %v297 = vld [vmem:[%s3 + $0x8] sm:$0xf]
    %v298 = vld [vmem:[%s3 + $0xc] sm:$0xf]
    %v299 = vld [vmem:[%s4] sm:$0x1]
    %v301 = vperm.slane %v299, 0
    %v307 = vunpack.c.l.b16 %v295
    %v308 = vunpack.c.l.b16 %v296
    %v309 = vunpack.c.l.b16 %v297
    %v310 = vunpack.c.l.b16 %v298
    %v311 = vpack.c.b16 %v308, %v307
    %v312 = vpack.c.b16 %v310, %v309
    %vm315 = vcmask 261120
    %v317 = vsel %vm315, %v285, 0
    %v320 = vsel %vm315, %v286, 0
    %v323 = vsel %vm315, %v287, 0
    %v326 = vsel %vm315, %v288, 0
    %v329 = vsel %vm315, %v289, 0
    %v332 = vsel %vm315, %v290, 0
    %v335 = vsel %vm315, %v291, 0
    %v338 = vsel %vm315, %v292, 0
    %v341 = vsel %vm315, %v293, 0
    %v344 = vsel %vm315, %v294, 0
    %346 = vmatpush.bf16.msra.mxu0 0
    %347 = vmatpush.bf16.msra.mxu0 0
    %348 = vmatpush.bf16.msra.mxu0 0
    %349 = vmatpush.bf16.msra.mxu0 0
    %350 = vmatpush.bf16.msra.mxu0 0
    %351 = vmatpush.bf16.msra.mxu0 0
    %352 = vmatpush.bf16.msra.mxu0 %v312
    %353 = vmatpush.bf16.msra.mxu0 %v311
    %354 = vmatmul.bf16.gmra.mxu0 %v317
    %v355 = vpop.f32.mrf.mxu0
    %v356 = vadd.f32 %v301, %v355
    %v357 = vpop.f32.mrf.mxu0
    %v358 = vadd.f32 %v301, %v357
    %359 = vmatmul.bf16.gmra.mxu0 %v320
    %v360 = vpop.f32.mrf.mxu0
    %v361 = vadd.f32 %v301, %v360
    %v362 = vpop.f32.mrf.mxu0
    %v363 = vadd.f32 %v301, %v362
    %364 = vmatmul.bf16.gmra.mxu0 %v323
    %v365 = vpop.f32.mrf.mxu0
    %v366 = vadd.f32 %v301, %v365
    %v367 = vpop.f32.mrf.mxu0
    %v368 = vadd.f32 %v301, %v367
    %369 = vmatmul.bf16.gmra.mxu0 %v326
    %v370 = vpop.f32.mrf.mxu0
    %v371 = vadd.f32 %v301, %v370
    %v372 = vpop.f32.mrf.mxu0
    %v373 = vadd.f32 %v301, %v372
    %374 = vmatmul.bf16.gmra.mxu0 %v329
    %v375 = vpop.f32.mrf.mxu0
    %v376 = vadd.f32 %v301, %v375
    %v377 = vpop.f32.mrf.mxu0
    %v378 = vadd.f32 %v301, %v377
    %379 = vmatmul.bf16.gmra.mxu0 %v332
    %v380 = vpop.f32.mrf.mxu0
    %v381 = vadd.f32 %v301, %v380
    %v382 = vpop.f32.mrf.mxu0
    %v383 = vadd.f32 %v301, %v382
    %384 = vmatmul.bf16.gmra.mxu0 %v335
    %v385 = vpop.f32.mrf.mxu0
    %v386 = vadd.f32 %v301, %v385
    %v387 = vpop.f32.mrf.mxu0
    %v388 = vadd.f32 %v301, %v387
    %389 = vmatmul.bf16.gmra.mxu0 %v338
    %v390 = vpop.f32.mrf.mxu0
    %v391 = vadd.f32 %v301, %v390
    %v392 = vpop.f32.mrf.mxu0
    %v393 = vadd.f32 %v301, %v392
    %394 = vmatmul.bf16.gmra.mxu0 %v341
    %v395 = vpop.f32.mrf.mxu0
    %v396 = vadd.f32 %v301, %v395
    %v397 = vpop.f32.mrf.mxu0
    %v398 = vadd.f32 %v301, %v397
    %399 = vmatmul.bf16.gmra.mxu0 %v344
    %v400 = vpop.f32.mrf.mxu0
    %v401 = vadd.f32 %v301, %v400
    %v402 = vpop.f32.mrf.mxu0
    %v403 = vadd.f32 %v301, %v402
    %404 = vdwg.mxu0
    %v405 = vmax.f32 %v356, 0.0
    %v406 = vmax.f32 %v358, 0.0
    %v407 = vmax.f32 %v361, 0.0
    %v408 = vmax.f32 %v363, 0.0
    %v409 = vmax.f32 %v366, 0.0
    %v410 = vmax.f32 %v368, 0.0
    %v411 = vmax.f32 %v371, 0.0
    %v412 = vmax.f32 %v373, 0.0
    %v413 = vmax.f32 %v376, 0.0
    %v414 = vmax.f32 %v378, 0.0
    %v415 = vmax.f32 %v381, 0.0
    %v416 = vmax.f32 %v383, 0.0
    %v417 = vmax.f32 %v386, 0.0
    %v418 = vmax.f32 %v388, 0.0
    %v419 = vmax.f32 %v391, 0.0
    %v420 = vmax.f32 %v393, 0.0
    %v421 = vmax.f32 %v396, 0.0
    %v422 = vmax.f32 %v398, 0.0
    %v423 = vmax.f32 %v401, 0.0
    %v424 = vmax.f32 %v403, 0.0
    %v425 = vpack.c.bf16 %v406, %v405
    %v426 = vpack.c.bf16 %v408, %v407
    %v427 = vpack.c.bf16 %v410, %v409
    %v428 = vpack.c.bf16 %v412, %v411
    %v429 = vpack.c.bf16 %v414, %v413
    %v430 = vpack.c.bf16 %v416, %v415
    %v431 = vpack.c.bf16 %v418, %v417
    %v432 = vpack.c.bf16 %v420, %v419
    %v433 = vpack.c.bf16 %v422, %v421
    %v434 = vpack.c.bf16 %v424, %v423
    %v435 = vld [vmem:[#allocation2] sm:$0xff]
    %v436 = vld [vmem:[#allocation2 + $0x8] sm:$0xff]
    %v437 = vld [vmem:[#allocation2 + $0x10] sm:$0xff]
    %v438 = vld [vmem:[#allocation2 + $0x18] sm:$0xff]
    %v439 = vld [vmem:[#allocation2 + $0x20] sm:$0xff]
    %v440 = vld [vmem:[#allocation2 + $0x28] sm:$0xff]
    %v441 = vld [vmem:[#allocation2 + $0x30] sm:$0xff]
    %v442 = vld [vmem:[#allocation2 + $0x38] sm:$0xff]
    %v443 = vld [vmem:[#allocation2 + $0x40] sm:$0xff]
    %v444 = vld [vmem:[#allocation2 + $0x48] sm:$0xff]
    %v445 = vld [vmem:[#allocation2 + $0x50] sm:$0xff]
    %v446 = vld [vmem:[#allocation2 + $0x58] sm:$0xff]
    %v447 = vld [vmem:[#allocation2 + $0x60] sm:$0xff]
    %v448 = vld [vmem:[#allocation2 + $0x68] sm:$0xff]
    %v449 = vld [vmem:[#allocation2 + $0x70] sm:$0xff]
    %v450 = vld [vmem:[#allocation2 + $0x78] sm:$0xff]
    %v451 = vld [vmem:[#allocation2 + $0x80] sm:$0xff]
    %v452 = vld [vmem:[#allocation2 + $0x88] sm:$0xff]
    %v453 = vld [vmem:[#allocation2 + $0x90] sm:$0xff]
    %v454 = vld [vmem:[#allocation2 + $0x98] sm:$0xff]
    %v455 = vld [vmem:[#allocation2 + $0xa0] sm:$0xff]
    %v456 = vld [vmem:[#allocation2 + $0xa8] sm:$0xff]
    %v457 = vld [vmem:[#allocation2 + $0xb0] sm:$0xff]
    %v458 = vld [vmem:[#allocation2 + $0xb8] sm:$0xff]
    %v459 = vld [vmem:[#allocation2 + $0xc0] sm:$0xff]
    %v460 = vld [vmem:[#allocation2 + $0xc8] sm:$0xff]
    %v461 = vld [vmem:[#allocation2 + $0xd0] sm:$0xff]
    %v462 = vld [vmem:[#allocation2 + $0xd8] sm:$0xff]
    %v463 = vld [vmem:[#allocation2 + $0xe0] sm:$0xff]
    %v464 = vld [vmem:[#allocation2 + $0xe8] sm:$0xff]
    %v465 = vld [vmem:[#allocation2 + $0xf0] sm:$0xff]
    %v466 = vld [vmem:[#allocation2 + $0xf8] sm:$0xff]
    %v467 = vld [vmem:[%s6] sm:$0xf]
    %v469 = vperm.slane %v467, 0
    %v470 = vperm.slane %v467, 1
    %v471 = vperm.slane %v467, 2
    %v472 = vperm.slane %v467, 3
    %v509 = vunpack.c.l.b16 %v435
    %v510 = vunpack.c.h.b16 %v435
    %v511 = vunpack.c.l.b16 %v436
    %v512 = vunpack.c.h.b16 %v436
    %v513 = vunpack.c.l.b16 %v437
    %v514 = vunpack.c.h.b16 %v437
    %v515 = vunpack.c.l.b16 %v438
    %v516 = vunpack.c.h.b16 %v438
    %v517 = vunpack.c.l.b16 %v439
    %v518 = vunpack.c.h.b16 %v439
    %v519 = vunpack.c.l.b16 %v440
    %v520 = vunpack.c.h.b16 %v440
    %v521 = vunpack.c.l.b16 %v441
    %v522 = vunpack.c.h.b16 %v441
    %v523 = vunpack.c.l.b16 %v442
    %v524 = vunpack.c.h.b16 %v442
    %v525 = vunpack.c.l.b16 %v443
    %v526 = vunpack.c.h.b16 %v443
    %v527 = vunpack.c.l.b16 %v444
    %v528 = vunpack.c.h.b16 %v444
    %v529 = vunpack.c.l.b16 %v445
    %v530 = vunpack.c.h.b16 %v445
    %v531 = vunpack.c.l.b16 %v446
    %v532 = vunpack.c.h.b16 %v446
    %v533 = vunpack.c.l.b16 %v447
    %v534 = vunpack.c.h.b16 %v447
    %v535 = vunpack.c.l.b16 %v448
    %v536 = vunpack.c.h.b16 %v448
    %v537 = vunpack.c.l.b16 %v449
    %v538 = vunpack.c.h.b16 %v449
    %v539 = vunpack.c.l.b16 %v450
    %v540 = vunpack.c.h.b16 %v450
    %v541 = vunpack.c.l.b16 %v451
    %v542 = vunpack.c.h.b16 %v451
    %v543 = vunpack.c.l.b16 %v452
    %v544 = vunpack.c.h.b16 %v452
    %v545 = vunpack.c.l.b16 %v453
    %v546 = vunpack.c.h.b16 %v453
    %v547 = vunpack.c.l.b16 %v454
    %v548 = vunpack.c.h.b16 %v454
    %v549 = vunpack.c.l.b16 %v455
    %v550 = vunpack.c.h.b16 %v455
    %v551 = vunpack.c.l.b16 %v456
    %v552 = vunpack.c.h.b16 %v456
    %v553 = vunpack.c.l.b16 %v457
    %v554 = vunpack.c.h.b16 %v457
    %v555 = vunpack.c.l.b16 %v458
    %v556 = vunpack.c.h.b16 %v458
    %v557 = vunpack.c.l.b16 %v459
    %v558 = vunpack.c.h.b16 %v459
    %v559 = vunpack.c.l.b16 %v460
    %v560 = vunpack.c.h.b16 %v460
    %v561 = vunpack.c.l.b16 %v461
    %v562 = vunpack.c.h.b16 %v461
    %v563 = vunpack.c.l.b16 %v462
    %v564 = vunpack.c.h.b16 %v462
    %v565 = vunpack.c.l.b16 %v463
    %v566 = vunpack.c.h.b16 %v463
    %v567 = vunpack.c.l.b16 %v464
    %v568 = vunpack.c.h.b16 %v464
    %v569 = vunpack.c.l.b16 %v465
    %v570 = vunpack.c.h.b16 %v465
    %v571 = vunpack.c.l.b16 %v466
    %v572 = vunpack.c.h.b16 %v466
    %v573 = vpack.c.b16 %v513, %v509
    %v574 = vpack.c.b16 %v514, %v510
    %v575 = vpack.c.b16 %v515, %v511
    %v576 = vpack.c.b16 %v516, %v512
    %v577 = vpack.c.b16 %v521, %v517
    %v578 = vpack.c.b16 %v522, %v518
    %v579 = vpack.c.b16 %v523, %v519
    %v580 = vpack.c.b16 %v524, %v520
    %v581 = vpack.c.b16 %v529, %v525
    %v582 = vpack.c.b16 %v530, %v526
    %v583 = vpack.c.b16 %v531, %v527
    %v584 = vpack.c.b16 %v532, %v528
    %v585 = vpack.c.b16 %v537, %v533
    %v586 = vpack.c.b16 %v538, %v534
    %v587 = vpack.c.b16 %v539, %v535
    %v588 = vpack.c.b16 %v540, %v536
    %v589 = vpack.c.b16 %v545, %v541
    %v590 = vpack.c.b16 %v546, %v542
    %v591 = vpack.c.b16 %v547, %v543
    %v592 = vpack.c.b16 %v548, %v544
    %v593 = vpack.c.b16 %v553, %v549
    %v594 = vpack.c.b16 %v554, %v550
    %v595 = vpack.c.b16 %v555, %v551
    %v596 = vpack.c.b16 %v556, %v552
    %v597 = vpack.c.b16 %v561, %v557
    %v598 = vpack.c.b16 %v562, %v558
    %v599 = vpack.c.b16 %v563, %v559
    %v600 = vpack.c.b16 %v564, %v560
    %v601 = vpack.c.b16 %v569, %v565
    %v602 = vpack.c.b16 %v570, %v566
    %v603 = vpack.c.b16 %v571, %v567
    %v604 = vpack.c.b16 %v572, %v568
    %637 = vmatpush.bf16.msra.mxu0 %v601
    %638 = vmatpush.bf16.msra.mxu0 %v597
    %639 = vmatpush.bf16.msra.mxu0 %v593
    %640 = vmatpush.bf16.msra.mxu0 %v589
    %641 = vmatpush.bf16.msra.mxu0 %v585
    %642 = vmatpush.bf16.msra.mxu0 %v581
    %643 = vmatpush.bf16.msra.mxu0 %v577
    %644 = vmatpush.bf16.msra.mxu0 %v573
    %645 = vmatmul.bf16.gmra.mxu0 %v425
    %v646 = vpop.f32.mrf.mxu0
    %v647 = vadd.f32 %v469, %v646
    %v648 = vpop.f32.mrf.mxu0
    %v649 = vadd.f32 %v469, %v648
    %650 = vmatmul.bf16.gmra.mxu0 %v426
    %v651 = vpop.f32.mrf.mxu0
    %v652 = vadd.f32 %v469, %v651
    %v653 = vpop.f32.mrf.mxu0
    %v654 = vadd.f32 %v469, %v653
    %655 = vmatmul.bf16.gmra.mxu0 %v427
    %v656 = vpop.f32.mrf.mxu0
    %v657 = vadd.f32 %v469, %v656
    %v658 = vpop.f32.mrf.mxu0
    %v659 = vadd.f32 %v469, %v658
    %660 = vmatmul.bf16.gmra.mxu0 %v428
    %v661 = vpop.f32.mrf.mxu0
    %v662 = vadd.f32 %v469, %v661
    %v663 = vpop.f32.mrf.mxu0
    %v664 = vadd.f32 %v469, %v663
    %665 = vmatmul.bf16.gmra.mxu0 %v429
    %v666 = vpop.f32.mrf.mxu0
    %v667 = vadd.f32 %v469, %v666
    %v668 = vpop.f32.mrf.mxu0
    %v669 = vadd.f32 %v469, %v668
    %670 = vmatmul.bf16.gmra.mxu0 %v430
    %v671 = vpop.f32.mrf.mxu0
    %v672 = vadd.f32 %v469, %v671
    %v673 = vpop.f32.mrf.mxu0
    %v674 = vadd.f32 %v469, %v673
    %675 = vmatmul.bf16.gmra.mxu0 %v431
    %v676 = vpop.f32.mrf.mxu0
    %v677 = vadd.f32 %v469, %v676
    %v678 = vpop.f32.mrf.mxu0
    %v679 = vadd.f32 %v469, %v678
    %680 = vmatmul.bf16.gmra.mxu0 %v432
    %v681 = vpop.f32.mrf.mxu0
    %v682 = vadd.f32 %v469, %v681
    %v683 = vpop.f32.mrf.mxu0
    %v684 = vadd.f32 %v469, %v683
    %685 = vmatmul.bf16.gmra.mxu0 %v433
    %v686 = vpop.f32.mrf.mxu0
    %v687 = vadd.f32 %v469, %v686
    %v688 = vpop.f32.mrf.mxu0
    %v689 = vadd.f32 %v469, %v688
    %690 = vmatmul.bf16.gmra.mxu0 %v434
    %v691 = vpop.f32.mrf.mxu0
    %v692 = vadd.f32 %v469, %v691
    %v693 = vpop.f32.mrf.mxu0
    %v694 = vadd.f32 %v469, %v693
    %695 = vdwg.mxu0
    %696 = vmatpush.bf16.msra.mxu0 %v602
    %697 = vmatpush.bf16.msra.mxu0 %v598
    %698 = vmatpush.bf16.msra.mxu0 %v594
    %699 = vmatpush.bf16.msra.mxu0 %v590
    %700 = vmatpush.bf16.msra.mxu0 %v586
    %701 = vmatpush.bf16.msra.mxu0 %v582
    %702 = vmatpush.bf16.msra.mxu0 %v578
    %703 = vmatpush.bf16.msra.mxu0 %v574
    %704 = vmatmul.bf16.gmra.mxu0 %v425
    %v705 = vpop.f32.mrf.mxu0
    %v706 = vadd.f32 %v470, %v705
    %v707 = vpop.f32.mrf.mxu0
    %v708 = vadd.f32 %v470, %v707
    %709 = vmatmul.bf16.gmra.mxu0 %v426
    %v710 = vpop.f32.mrf.mxu0
    %v711 = vadd.f32 %v470, %v710
    %v712 = vpop.f32.mrf.mxu0
    %v713 = vadd.f32 %v470, %v712
    %714 = vmatmul.bf16.gmra.mxu0 %v427
    %v715 = vpop.f32.mrf.mxu0
    %v716 = vadd.f32 %v470, %v715
    %v717 = vpop.f32.mrf.mxu0
    %v718 = vadd.f32 %v470, %v717
    %719 = vmatmul.bf16.gmra.mxu0 %v428
    %v720 = vpop.f32.mrf.mxu0
    %v721 = vadd.f32 %v470, %v720
    %v722 = vpop.f32.mrf.mxu0
    %v723 = vadd.f32 %v470, %v722
    %724 = vmatmul.bf16.gmra.mxu0 %v429
    %v725 = vpop.f32.mrf.mxu0
    %v726 = vadd.f32 %v470, %v725
    %v727 = vpop.f32.mrf.mxu0
    %v728 = vadd.f32 %v470, %v727
    %729 = vmatmul.bf16.gmra.mxu0 %v430
    %v730 = vpop.f32.mrf.mxu0
    %v731 = vadd.f32 %v470, %v730
    %v732 = vpop.f32.mrf.mxu0
    %v733 = vadd.f32 %v470, %v732
    %734 = vmatmul.bf16.gmra.mxu0 %v431
    %v735 = vpop.f32.mrf.mxu0
    %v736 = vadd.f32 %v470, %v735
    %v737 = vpop.f32.mrf.mxu0
    %v738 = vadd.f32 %v470, %v737
    %739 = vmatmul.bf16.gmra.mxu0 %v432
    %v740 = vpop.f32.mrf.mxu0
    %v741 = vadd.f32 %v470, %v740
    %v742 = vpop.f32.mrf.mxu0
    %v743 = vadd.f32 %v470, %v742
    %744 = vmatmul.bf16.gmra.mxu0 %v433
    %v745 = vpop.f32.mrf.mxu0
    %v746 = vadd.f32 %v470, %v745
    %v747 = vpop.f32.mrf.mxu0
    %v748 = vadd.f32 %v470, %v747
    %749 = vmatmul.bf16.gmra.mxu0 %v434
    %v750 = vpop.f32.mrf.mxu0
    %v751 = vadd.f32 %v470, %v750
    %v752 = vpop.f32.mrf.mxu0
    %v753 = vadd.f32 %v470, %v752
    %754 = vdwg.mxu0
    %755 = vmatpush.bf16.msra.mxu0 %v603
    %756 = vmatpush.bf16.msra.mxu0 %v599
    %757 = vmatpush.bf16.msra.mxu0 %v595
    %758 = vmatpush.bf16.msra.mxu0 %v591
    %759 = vmatpush.bf16.msra.mxu0 %v587
    %760 = vmatpush.bf16.msra.mxu0 %v583
    %761 = vmatpush.bf16.msra.mxu0 %v579
    %762 = vmatpush.bf16.msra.mxu0 %v575
    %763 = vmatmul.bf16.gmra.mxu0 %v425
    %v764 = vpop.f32.mrf.mxu0
    %v765 = vadd.f32 %v471, %v764
    %v766 = vpop.f32.mrf.mxu0
    %v767 = vadd.f32 %v471, %v766
    %768 = vmatmul.bf16.gmra.mxu0 %v426
    %v769 = vpop.f32.mrf.mxu0
    %v770 = vadd.f32 %v471, %v769
    %v771 = vpop.f32.mrf.mxu0
    %v772 = vadd.f32 %v471, %v771
    %773 = vmatmul.bf16.gmra.mxu0 %v427
    %v774 = vpop.f32.mrf.mxu0
    %v775 = vadd.f32 %v471, %v774
    %v776 = vpop.f32.mrf.mxu0
    %v777 = vadd.f32 %v471, %v776
    %778 = vmatmul.bf16.gmra.mxu0 %v428
    %v779 = vpop.f32.mrf.mxu0
    %v780 = vadd.f32 %v471, %v779
    %v781 = vpop.f32.mrf.mxu0
    %v782 = vadd.f32 %v471, %v781
    %783 = vmatmul.bf16.gmra.mxu0 %v429
    %v784 = vpop.f32.mrf.mxu0
    %v785 = vadd.f32 %v471, %v784
    %v786 = vpop.f32.mrf.mxu0
    %v787 = vadd.f32 %v471, %v786
    %788 = vmatmul.bf16.gmra.mxu0 %v430
    %v789 = vpop.f32.mrf.mxu0
    %v790 = vadd.f32 %v471, %v789
    %v791 = vpop.f32.mrf.mxu0
    %v792 = vadd.f32 %v471, %v791
    %793 = vmatmul.bf16.gmra.mxu0 %v431
    %v794 = vpop.f32.mrf.mxu0
    %v795 = vadd.f32 %v471, %v794
    %v796 = vpop.f32.mrf.mxu0
    %v797 = vadd.f32 %v471, %v796
    %798 = vmatmul.bf16.gmra.mxu0 %v432
    %v799 = vpop.f32.mrf.mxu0
    %v800 = vadd.f32 %v471, %v799
    %v801 = vpop.f32.mrf.mxu0
    %v802 = vadd.f32 %v471, %v801
    %803 = vmatmul.bf16.gmra.mxu0 %v433
    %v804 = vpop.f32.mrf.mxu0
    %v805 = vadd.f32 %v471, %v804
    %v806 = vpop.f32.mrf.mxu0
    %v807 = vadd.f32 %v471, %v806
    %808 = vmatmul.bf16.gmra.mxu0 %v434
    %v809 = vpop.f32.mrf.mxu0
    %v810 = vadd.f32 %v471, %v809
    %v811 = vpop.f32.mrf.mxu0
    %v812 = vadd.f32 %v471, %v811
    %813 = vdwg.mxu0
    %814 = vmatpush.bf16.msra.mxu0 %v604
    %815 = vmatpush.bf16.msra.mxu0 %v600
    %816 = vmatpush.bf16.msra.mxu0 %v596
    %817 = vmatpush.bf16.msra.mxu0 %v592
    %818 = vmatpush.bf16.msra.mxu0 %v588
    %819 = vmatpush.bf16.msra.mxu0 %v584
    %820 = vmatpush.bf16.msra.mxu0 %v580
    %821 = vmatpush.bf16.msra.mxu0 %v576
    %822 = vmatmul.bf16.gmra.mxu0 %v425
    %v823 = vpop.f32.mrf.mxu0
    %v824 = vadd.f32 %v472, %v823
    %v825 = vpop.f32.mrf.mxu0
    %v826 = vadd.f32 %v472, %v825
    %827 = vmatmul.bf16.gmra.mxu0 %v426
    %v828 = vpop.f32.mrf.mxu0
    %v829 = vadd.f32 %v472, %v828
    %v830 = vpop.f32.mrf.mxu0
    %v831 = vadd.f32 %v472, %v830
    %832 = vmatmul.bf16.gmra.mxu0 %v427
    %v833 = vpop.f32.mrf.mxu0
    %v834 = vadd.f32 %v472, %v833
    %v835 = vpop.f32.mrf.mxu0
    %v836 = vadd.f32 %v472, %v835
    %837 = vmatmul.bf16.gmra.mxu0 %v428
    %v838 = vpop.f32.mrf.mxu0
    %v839 = vadd.f32 %v472, %v838
    %v840 = vpop.f32.mrf.mxu0
    %v841 = vadd.f32 %v472, %v840
    %842 = vmatmul.bf16.gmra.mxu0 %v429
    %v843 = vpop.f32.mrf.mxu0
    %v844 = vadd.f32 %v472, %v843
    %v845 = vpop.f32.mrf.mxu0
    %v846 = vadd.f32 %v472, %v845
    %847 = vmatmul.bf16.gmra.mxu0 %v430
    %v848 = vpop.f32.mrf.mxu0
    %v849 = vadd.f32 %v472, %v848
    %v850 = vpop.f32.mrf.mxu0
    %v851 = vadd.f32 %v472, %v850
    %852 = vmatmul.bf16.gmra.mxu0 %v431
    %v853 = vpop.f32.mrf.mxu0
    %v854 = vadd.f32 %v472, %v853
    %v855 = vpop.f32.mrf.mxu0
    %v856 = vadd.f32 %v472, %v855
    %857 = vmatmul.bf16.gmra.mxu0 %v432
    %v858 = vpop.f32.mrf.mxu0
    %v859 = vadd.f32 %v472, %v858
    %v860 = vpop.f32.mrf.mxu0
    %v861 = vadd.f32 %v472, %v860
    %862 = vmatmul.bf16.gmra.mxu0 %v433
    %v863 = vpop.f32.mrf.mxu0
    %v864 = vadd.f32 %v472, %v863
    %v865 = vpop.f32.mrf.mxu0
    %v866 = vadd.f32 %v472, %v865
    %867 = vmatmul.bf16.gmra.mxu0 %v434
    %v868 = vpop.f32.mrf.mxu0
    %v869 = vadd.f32 %v472, %v868
    %v870 = vpop.f32.mrf.mxu0
    %v871 = vadd.f32 %v472, %v870
    %872 = vdwg.mxu0
    %v873 = vmax.f32 %v647, 0.0
    %v874 = vmax.f32 %v706, 0.0
    %v875 = vmax.f32 %v765, 0.0
    %v876 = vmax.f32 %v824, 0.0
    %v877 = vmax.f32 %v649, 0.0
    %v878 = vmax.f32 %v708, 0.0
    %v879 = vmax.f32 %v767, 0.0
    %v880 = vmax.f32 %v826, 0.0
    %v881 = vmax.f32 %v652, 0.0
    %v882 = vmax.f32 %v711, 0.0
    %v883 = vmax.f32 %v770, 0.0
    %v884 = vmax.f32 %v829, 0.0
    %v885 = vmax.f32 %v654, 0.0
    %v886 = vmax.f32 %v713, 0.0
    %v887 = vmax.f32 %v772, 0.0
    %v888 = vmax.f32 %v831, 0.0
    %v889 = vmax.f32 %v657, 0.0
    %v890 = vmax.f32 %v716, 0.0
    %v891 = vmax.f32 %v775, 0.0
    %v892 = vmax.f32 %v834, 0.0
    %v893 = vmax.f32 %v659, 0.0
    %v894 = vmax.f32 %v718, 0.0
    %v895 = vmax.f32 %v777, 0.0
    %v896 = vmax.f32 %v836, 0.0
    %v897 = vmax.f32 %v662, 0.0
    %v898 = vmax.f32 %v721, 0.0
    %v899 = vmax.f32 %v780, 0.0
    %v900 = vmax.f32 %v839, 0.0
    %v901 = vmax.f32 %v664, 0.0
    %v902 = vmax.f32 %v723, 0.0
    %v903 = vmax.f32 %v782, 0.0
    %v904 = vmax.f32 %v841, 0.0
    %v905 = vmax.f32 %v667, 0.0
    %v906 = vmax.f32 %v726, 0.0
    %v907 = vmax.f32 %v785, 0.0
    %v908 = vmax.f32 %v844, 0.0
    %v909 = vmax.f32 %v669, 0.0
    %v910 = vmax.f32 %v728, 0.0
    %v911 = vmax.f32 %v787, 0.0
    %v912 = vmax.f32 %v846, 0.0
    %v913 = vmax.f32 %v672, 0.0
    %v914 = vmax.f32 %v731, 0.0
    %v915 = vmax.f32 %v790, 0.0
    %v916 = vmax.f32 %v849, 0.0
    %v917 = vmax.f32 %v674, 0.0
    %v918 = vmax.f32 %v733, 0.0
    %v919 = vmax.f32 %v792, 0.0
    %v920 = vmax.f32 %v851, 0.0
    %v921 = vmax.f32 %v677, 0.0
    %v922 = vmax.f32 %v736, 0.0
    %v923 = vmax.f32 %v795, 0.0
    %v924 = vmax.f32 %v854, 0.0
    %v925 = vmax.f32 %v679, 0.0
    %v926 = vmax.f32 %v738, 0.0
    %v927 = vmax.f32 %v797, 0.0
    %v928 = vmax.f32 %v856, 0.0
    %v929 = vmax.f32 %v682, 0.0
    %v930 = vmax.f32 %v741, 0.0
    %v931 = vmax.f32 %v800, 0.0
    %v932 = vmax.f32 %v859, 0.0
    %v933 = vmax.f32 %v684, 0.0
    %v934 = vmax.f32 %v743, 0.0
    %v935 = vmax.f32 %v802, 0.0
    %v936 = vmax.f32 %v861, 0.0
    %v937 = vmax.f32 %v687, 0.0
    %v938 = vmax.f32 %v746, 0.0
    %v939 = vmax.f32 %v805, 0.0
    %v940 = vmax.f32 %v864, 0.0
    %v941 = vmax.f32 %v689, 0.0
    %v942 = vmax.f32 %v748, 0.0
    %v943 = vmax.f32 %v807, 0.0
    %v944 = vmax.f32 %v866, 0.0
    %v945 = vmax.f32 %v692, 0.0
    %v946 = vmax.f32 %v751, 0.0
    %v947 = vmax.f32 %v810, 0.0
    %v948 = vmax.f32 %v869, 0.0
    %v949 = vmax.f32 %v694, 0.0
    %v950 = vmax.f32 %v753, 0.0
    %v951 = vmax.f32 %v812, 0.0
    %v952 = vmax.f32 %v871, 0.0
    %v953 = vpack.c.bf16 %v877, %v873
    %v954 = vpack.c.bf16 %v878, %v874
    %v955 = vpack.c.bf16 %v879, %v875
    %v956 = vpack.c.bf16 %v880, %v876
    %v957 = vpack.c.bf16 %v885, %v881
    %v958 = vpack.c.bf16 %v886, %v882
    %v959 = vpack.c.bf16 %v887, %v883
    %v960 = vpack.c.bf16 %v888, %v884
    %v961 = vpack.c.bf16 %v893, %v889
    %v962 = vpack.c.bf16 %v894, %v890
    %v963 = vpack.c.bf16 %v895, %v891
    %v964 = vpack.c.bf16 %v896, %v892
    %v965 = vpack.c.bf16 %v901, %v897
    %v966 = vpack.c.bf16 %v902, %v898
    %v967 = vpack.c.bf16 %v903, %v899
    %v968 = vpack.c.bf16 %v904, %v900
    %v969 = vpack.c.bf16 %v909, %v905
    %v970 = vpack.c.bf16 %v910, %v906
    %v971 = vpack.c.bf16 %v911, %v907
    %v972 = vpack.c.bf16 %v912, %v908
    %v973 = vpack.c.bf16 %v917, %v913
    %v974 = vpack.c.bf16 %v918, %v914
    %v975 = vpack.c.bf16 %v919, %v915
    %v976 = vpack.c.bf16 %v920, %v916
    %v977 = vpack.c.bf16 %v925, %v921
    %v978 = vpack.c.bf16 %v926, %v922
    %v979 = vpack.c.bf16 %v927, %v923
    %v980 = vpack.c.bf16 %v928, %v924
    %v981 = vpack.c.bf16 %v933, %v929
    %v982 = vpack.c.bf16 %v934, %v930
    %v983 = vpack.c.bf16 %v935, %v931
    %v984 = vpack.c.bf16 %v936, %v932
    %v985 = vpack.c.bf16 %v941, %v937
    %v986 = vpack.c.bf16 %v942, %v938
    %v987 = vpack.c.bf16 %v943, %v939
    %v988 = vpack.c.bf16 %v944, %v940
    %v989 = vpack.c.bf16 %v949, %v945
    %v990 = vpack.c.bf16 %v950, %v946
    %v991 = vpack.c.bf16 %v951, %v947
    %v992 = vpack.c.bf16 %v952, %v948
    %v993 = vld [vmem:[#allocation5] sm:$0xf]
    %v994 = vld [vmem:[#allocation5 + $0x4] sm:$0xf]
    %v995 = vld [vmem:[#allocation5 + $0x8] sm:$0xf]
    %v996 = vld [vmem:[#allocation5 + $0xc] sm:$0xf]
    %v997 = vld [vmem:[#allocation5 + $0x10] sm:$0xf]
    %v998 = vld [vmem:[#allocation5 + $0x14] sm:$0xf]
    %v999 = vld [vmem:[#allocation5 + $0x18] sm:$0xf]
    %v1000 = vld [vmem:[#allocation5 + $0x1c] sm:$0xf]
    %v1001 = vld [vmem:[#allocation5 + $0x20] sm:$0xf]
    %v1002 = vld [vmem:[#allocation5 + $0x24] sm:$0xf]
    %v1003 = vld [vmem:[#allocation5 + $0x28] sm:$0xf]
    %v1004 = vld [vmem:[#allocation5 + $0x2c] sm:$0xf]
    %v1005 = vld [vmem:[#allocation5 + $0x30] sm:$0xf]
    %v1006 = vld [vmem:[#allocation5 + $0x34] sm:$0xf]
    %v1007 = vld [vmem:[#allocation5 + $0x38] sm:$0xf]
    %v1008 = vld [vmem:[#allocation5 + $0x3c] sm:$0xf]
    %v1009 = vld [vmem:[#allocation5 + $0x40] sm:$0xf]
    %v1010 = vld [vmem:[#allocation5 + $0x44] sm:$0xf]
    %v1011 = vld [vmem:[#allocation5 + $0x48] sm:$0xf]
    %v1012 = vld [vmem:[#allocation5 + $0x4c] sm:$0xf]
    %v1013 = vld [vmem:[#allocation5 + $0x50] sm:$0xf]
    %v1014 = vld [vmem:[#allocation5 + $0x54] sm:$0xf]
    %v1015 = vld [vmem:[#allocation5 + $0x58] sm:$0xf]
    %v1016 = vld [vmem:[#allocation5 + $0x5c] sm:$0xf]
    %v1017 = vld [vmem:[#allocation5 + $0x60] sm:$0xf]
    %v1018 = vld [vmem:[#allocation5 + $0x64] sm:$0xf]
    %v1019 = vld [vmem:[#allocation5 + $0x68] sm:$0xf]
    %v1020 = vld [vmem:[#allocation5 + $0x6c] sm:$0xf]
    %v1021 = vld [vmem:[#allocation5 + $0x70] sm:$0xf]
    %v1022 = vld [vmem:[#allocation5 + $0x74] sm:$0xf]
    %v1023 = vld [vmem:[#allocation5 + $0x78] sm:$0xf]
    %v1024 = vld [vmem:[#allocation5 + $0x7c] sm:$0xf]
    %v1025 = vld [vmem:[#allocation5 + $0x80] sm:$0xf]
    %v1026 = vld [vmem:[#allocation5 + $0x84] sm:$0xf]
    %v1027 = vld [vmem:[#allocation5 + $0x88] sm:$0xf]
    %v1028 = vld [vmem:[#allocation5 + $0x8c] sm:$0xf]
    %v1029 = vld [vmem:[#allocation5 + $0x90] sm:$0xf]
    %v1030 = vld [vmem:[#allocation5 + $0x94] sm:$0xf]
    %v1031 = vld [vmem:[#allocation5 + $0x98] sm:$0xf]
    %v1032 = vld [vmem:[#allocation5 + $0x9c] sm:$0xf]
    %v1033 = vld [vmem:[#allocation5 + $0xa0] sm:$0xf]
    %v1034 = vld [vmem:[#allocation5 + $0xa4] sm:$0xf]
    %v1035 = vld [vmem:[#allocation5 + $0xa8] sm:$0xf]
    %v1036 = vld [vmem:[#allocation5 + $0xac] sm:$0xf]
    %v1037 = vld [vmem:[#allocation5 + $0xb0] sm:$0xf]
    %v1038 = vld [vmem:[#allocation5 + $0xb4] sm:$0xf]
    %v1039 = vld [vmem:[#allocation5 + $0xb8] sm:$0xf]
    %v1040 = vld [vmem:[#allocation5 + $0xbc] sm:$0xf]
    %v1041 = vld [vmem:[#allocation5 + $0xc0] sm:$0xf]
    %v1042 = vld [vmem:[#allocation5 + $0xc4] sm:$0xf]
    %v1043 = vld [vmem:[#allocation5 + $0xc8] sm:$0xf]
    %v1044 = vld [vmem:[#allocation5 + $0xcc] sm:$0xf]
    %v1045 = vld [vmem:[#allocation5 + $0xd0] sm:$0xf]
    %v1046 = vld [vmem:[#allocation5 + $0xd4] sm:$0xf]
    %v1047 = vld [vmem:[#allocation5 + $0xd8] sm:$0xf]
    %v1048 = vld [vmem:[#allocation5 + $0xdc] sm:$0xf]
    %v1049 = vld [vmem:[#allocation5 + $0xe0] sm:$0xf]
    %v1050 = vld [vmem:[#allocation5 + $0xe4] sm:$0xf]
    %v1051 = vld [vmem:[#allocation5 + $0xe8] sm:$0xf]
    %v1052 = vld [vmem:[#allocation5 + $0xec] sm:$0xf]
    %v1053 = vld [vmem:[#allocation5 + $0xf0] sm:$0xf]
    %v1054 = vld [vmem:[#allocation5 + $0xf4] sm:$0xf]
    %v1055 = vld [vmem:[#allocation5 + $0xf8] sm:$0xf]
    %v1056 = vld [vmem:[#allocation5 + $0xfc] sm:$0xf]
    %v1057 = vld [vmem:[%s8] sm:$0x1]
    %v1059 = vperm.slane %v1057, 0
    %v1125 = vunpack.c.l.b16 %v993
    %v1126 = vunpack.c.l.b16 %v994
    %v1127 = vunpack.c.l.b16 %v995
    %v1128 = vunpack.c.l.b16 %v996
    %v1129 = vunpack.c.l.b16 %v997
    %v1130 = vunpack.c.l.b16 %v998
    %v1131 = vunpack.c.l.b16 %v999
    %v1132 = vunpack.c.l.b16 %v1000
    %v1133 = vunpack.c.l.b16 %v1001
    %v1134 = vunpack.c.l.b16 %v1002
    %v1135 = vunpack.c.l.b16 %v1003
    %v1136 = vunpack.c.l.b16 %v1004
    %v1137 = vunpack.c.l.b16 %v1005
    %v1138 = vunpack.c.l.b16 %v1006
    %v1139 = vunpack.c.l.b16 %v1007
    %v1140 = vunpack.c.l.b16 %v1008
    %v1141 = vunpack.c.l.b16 %v1009
    %v1142 = vunpack.c.l.b16 %v1010
    %v1143 = vunpack.c.l.b16 %v1011
    %v1144 = vunpack.c.l.b16 %v1012
    %v1145 = vunpack.c.l.b16 %v1013
    %v1146 = vunpack.c.l.b16 %v1014
    %v1147 = vunpack.c.l.b16 %v1015
    %v1148 = vunpack.c.l.b16 %v1016
    %v1149 = vunpack.c.l.b16 %v1017
    %v1150 = vunpack.c.l.b16 %v1018
    %v1151 = vunpack.c.l.b16 %v1019
    %v1152 = vunpack.c.l.b16 %v1020
    %v1153 = vunpack.c.l.b16 %v1021
    %v1154 = vunpack.c.l.b16 %v1022
    %v1155 = vunpack.c.l.b16 %v1023
    %v1156 = vunpack.c.l.b16 %v1024
    %v1157 = vunpack.c.l.b16 %v1025
    %v1158 = vunpack.c.l.b16 %v1026
    %v1159 = vunpack.c.l.b16 %v1027
    %v1160 = vunpack.c.l.b16 %v1028
    %v1161 = vunpack.c.l.b16 %v1029
    %v1162 = vunpack.c.l.b16 %v1030
    %v1163 = vunpack.c.l.b16 %v1031
    %v1164 = vunpack.c.l.b16 %v1032
    %v1165 = vunpack.c.l.b16 %v1033
    %v1166 = vunpack.c.l.b16 %v1034
    %v1167 = vunpack.c.l.b16 %v1035
    %v1168 = vunpack.c.l.b16 %v1036
    %v1169 = vunpack.c.l.b16 %v1037
    %v1170 = vunpack.c.l.b16 %v1038
    %v1171 = vunpack.c.l.b16 %v1039
    %v1172 = vunpack.c.l.b16 %v1040
    %v1173 = vunpack.c.l.b16 %v1041
    %v1174 = vunpack.c.l.b16 %v1042
    %v1175 = vunpack.c.l.b16 %v1043
    %v1176 = vunpack.c.l.b16 %v1044
    %v1177 = vunpack.c.l.b16 %v1045
    %v1178 = vunpack.c.l.b16 %v1046
    %v1179 = vunpack.c.l.b16 %v1047
    %v1180 = vunpack.c.l.b16 %v1048
    %v1181 = vunpack.c.l.b16 %v1049
    %v1182 = vunpack.c.l.b16 %v1050
    %v1183 = vunpack.c.l.b16 %v1051
    %v1184 = vunpack.c.l.b16 %v1052
    %v1185 = vunpack.c.l.b16 %v1053
    %v1186 = vunpack.c.l.b16 %v1054
    %v1187 = vunpack.c.l.b16 %v1055
    %v1188 = vunpack.c.l.b16 %v1056
    %v1189 = vpack.c.b16 %v1126, %v1125
    %v1190 = vpack.c.b16 %v1128, %v1127
    %v1191 = vpack.c.b16 %v1130, %v1129
    %v1192 = vpack.c.b16 %v1132, %v1131
    %v1193 = vpack.c.b16 %v1134, %v1133
    %v1194 = vpack.c.b16 %v1136, %v1135
    %v1195 = vpack.c.b16 %v1138, %v1137
    %v1196 = vpack.c.b16 %v1140, %v1139
    %v1197 = vpack.c.b16 %v1142, %v1141
    %v1198 = vpack.c.b16 %v1144, %v1143
    %v1199 = vpack.c.b16 %v1146, %v1145
    %v1200 = vpack.c.b16 %v1148, %v1147
    %v1201 = vpack.c.b16 %v1150, %v1149
    %v1202 = vpack.c.b16 %v1152, %v1151
    %v1203 = vpack.c.b16 %v1154, %v1153
    %v1204 = vpack.c.b16 %v1156, %v1155
    %v1205 = vpack.c.b16 %v1158, %v1157
    %v1206 = vpack.c.b16 %v1160, %v1159
    %v1207 = vpack.c.b16 %v1162, %v1161
    %v1208 = vpack.c.b16 %v1164, %v1163
    %v1209 = vpack.c.b16 %v1166, %v1165
    %v1210 = vpack.c.b16 %v1168, %v1167
    %v1211 = vpack.c.b16 %v1170, %v1169
    %v1212 = vpack.c.b16 %v1172, %v1171
    %v1213 = vpack.c.b16 %v1174, %v1173
    %v1214 = vpack.c.b16 %v1176, %v1175
    %v1215 = vpack.c.b16 %v1178, %v1177
    %v1216 = vpack.c.b16 %v1180, %v1179
    %v1217 = vpack.c.b16 %v1182, %v1181
    %v1218 = vpack.c.b16 %v1184, %v1183
    %v1219 = vpack.c.b16 %v1186, %v1185
    %v1220 = vpack.c.b16 %v1188, %v1187
    %1253 = vmatpush.bf16.msra.mxu0 %v1196
    %1254 = vmatpush.bf16.msra.mxu0 %v1195
    %1255 = vmatpush.bf16.msra.mxu0 %v1194
    %1256 = vmatpush.bf16.msra.mxu0 %v1193
    %1257 = vmatpush.bf16.msra.mxu0 %v1192
    %1258 = vmatpush.bf16.msra.mxu0 %v1191
    %1259 = vmatpush.bf16.msra.mxu0 %v1190
    %1260 = vmatpush.bf16.msra.mxu0 %v1189
    %1261 = vmatmul.bf16.gmra.mxu0 %v953
    %v1262 = vpop.f32.mrf.mxu0
    %v1263 = vadd.f32 %v1059, %v1262
    %v1264 = vpop.f32.mrf.mxu0
    %v1265 = vadd.f32 %v1059, %v1264
    %1266 = vmatmul.bf16.gmra.mxu0 %v957
    %v1267 = vpop.f32.mrf.mxu0
    %v1268 = vadd.f32 %v1059, %v1267
    %v1269 = vpop.f32.mrf.mxu0
    %v1270 = vadd.f32 %v1059, %v1269
    %1271 = vmatmul.bf16.gmra.mxu0 %v961
    %v1272 = vpop.f32.mrf.mxu0
    %v1273 = vadd.f32 %v1059, %v1272
    %v1274 = vpop.f32.mrf.mxu0
    %v1275 = vadd.f32 %v1059, %v1274
    %1276 = vmatmul.bf16.gmra.mxu0 %v965
    %v1277 = vpop.f32.mrf.mxu0
    %v1278 = vadd.f32 %v1059, %v1277
    %v1279 = vpop.f32.mrf.mxu0
    %v1280 = vadd.f32 %v1059, %v1279
    %1281 = vmatmul.bf16.gmra.mxu0 %v969
    %v1282 = vpop.f32.mrf.mxu0
    %v1283 = vadd.f32 %v1059, %v1282
    %v1284 = vpop.f32.mrf.mxu0
    %v1285 = vadd.f32 %v1059, %v1284
    %1286 = vmatmul.bf16.gmra.mxu0 %v973
    %v1287 = vpop.f32.mrf.mxu0
    %v1288 = vadd.f32 %v1059, %v1287
    %v1289 = vpop.f32.mrf.mxu0
    %v1290 = vadd.f32 %v1059, %v1289
    %1291 = vmatmul.bf16.gmra.mxu0 %v977
    %v1292 = vpop.f32.mrf.mxu0
    %v1293 = vadd.f32 %v1059, %v1292
    %v1294 = vpop.f32.mrf.mxu0
    %v1295 = vadd.f32 %v1059, %v1294
    %1296 = vmatmul.bf16.gmra.mxu0 %v981
    %v1297 = vpop.f32.mrf.mxu0
    %v1298 = vadd.f32 %v1059, %v1297
    %v1299 = vpop.f32.mrf.mxu0
    %v1300 = vadd.f32 %v1059, %v1299
    %1301 = vmatmul.bf16.gmra.mxu0 %v985
    %v1302 = vpop.f32.mrf.mxu0
    %v1303 = vadd.f32 %v1059, %v1302
    %v1304 = vpop.f32.mrf.mxu0
    %v1305 = vadd.f32 %v1059, %v1304
    %1306 = vmatmul.bf16.gmra.mxu0 %v989
    %v1307 = vpop.f32.mrf.mxu0
    %v1308 = vadd.f32 %v1059, %v1307
    %v1309 = vpop.f32.mrf.mxu0
    %v1310 = vadd.f32 %v1059, %v1309
    %1311 = vdwg.mxu0
    %1312 = vmatpush.bf16.msra.mxu0 %v1204
    %1313 = vmatpush.bf16.msra.mxu0 %v1203
    %1314 = vmatpush.bf16.msra.mxu0 %v1202
    %1315 = vmatpush.bf16.msra.mxu0 %v1201
    %1316 = vmatpush.bf16.msra.mxu0 %v1200
    %1317 = vmatpush.bf16.msra.mxu0 %v1199
    %1318 = vmatpush.bf16.msra.mxu0 %v1198
    %1319 = vmatpush.bf16.msra.mxu0 %v1197
    %1320 = vmatmul.bf16.gmra.mxu0 %v954
    %v1321 = vpop.f32.mrf.mxu0
    %v1322 = vadd.f32 %v1263, %v1321
    %v1323 = vpop.f32.mrf.mxu0
    %v1324 = vadd.f32 %v1265, %v1323
    %1325 = vmatmul.bf16.gmra.mxu0 %v958
    %v1326 = vpop.f32.mrf.mxu0
    %v1327 = vadd.f32 %v1268, %v1326
    %v1328 = vpop.f32.mrf.mxu0
    %v1329 = vadd.f32 %v1270, %v1328
    %1330 = vmatmul.bf16.gmra.mxu0 %v962
    %v1331 = vpop.f32.mrf.mxu0
    %v1332 = vadd.f32 %v1273, %v1331
    %v1333 = vpop.f32.mrf.mxu0
    %v1334 = vadd.f32 %v1275, %v1333
    %1335 = vmatmul.bf16.gmra.mxu0 %v966
    %v1336 = vpop.f32.mrf.mxu0
    %v1337 = vadd.f32 %v1278, %v1336
    %v1338 = vpop.f32.mrf.mxu0
    %v1339 = vadd.f32 %v1280, %v1338
    %1340 = vmatmul.bf16.gmra.mxu0 %v970
    %v1341 = vpop.f32.mrf.mxu0
    %v1342 = vadd.f32 %v1283, %v1341
    %v1343 = vpop.f32.mrf.mxu0
    %v1344 = vadd.f32 %v1285, %v1343
    %1345 = vmatmul.bf16.gmra.mxu0 %v974
    %v1346 = vpop.f32.mrf.mxu0
    %v1347 = vadd.f32 %v1288, %v1346
    %v1348 = vpop.f32.mrf.mxu0
    %v1349 = vadd.f32 %v1290, %v1348
    %1350 = vmatmul.bf16.gmra.mxu0 %v978
    %v1351 = vpop.f32.mrf.mxu0
    %v1352 = vadd.f32 %v1293, %v1351
    %v1353 = vpop.f32.mrf.mxu0
    %v1354 = vadd.f32 %v1295, %v1353
    %1355 = vmatmul.bf16.gmra.mxu0 %v982
    %v1356 = vpop.f32.mrf.mxu0
    %v1357 = vadd.f32 %v1298, %v1356
    %v1358 = vpop.f32.mrf.mxu0
    %v1359 = vadd.f32 %v1300, %v1358
    %1360 = vmatmul.bf16.gmra.mxu0 %v986
    %v1361 = vpop.f32.mrf.mxu0
    %v1362 = vadd.f32 %v1303, %v1361
    %v1363 = vpop.f32.mrf.mxu0
    %v1364 = vadd.f32 %v1305, %v1363
    %1365 = vmatmul.bf16.gmra.mxu0 %v990
    %v1366 = vpop.f32.mrf.mxu0
    %v1367 = vadd.f32 %v1308, %v1366
    %v1368 = vpop.f32.mrf.mxu0
    %v1369 = vadd.f32 %v1310, %v1368
    %1370 = vdwg.mxu0
    %1371 = vmatpush.bf16.msra.mxu0 %v1212
    %1372 = vmatpush.bf16.msra.mxu0 %v1211
    %1373 = vmatpush.bf16.msra.mxu0 %v1210
    %1374 = vmatpush.bf16.msra.mxu0 %v1209
    %1375 = vmatpush.bf16.msra.mxu0 %v1208
    %1376 = vmatpush.bf16.msra.mxu0 %v1207
    %1377 = vmatpush.bf16.msra.mxu0 %v1206
    %1378 = vmatpush.bf16.msra.mxu0 %v1205
    %1379 = vmatmul.bf16.gmra.mxu0 %v955
    %v1380 = vpop.f32.mrf.mxu0
    %v1381 = vadd.f32 %v1322, %v1380
    %v1382 = vpop.f32.mrf.mxu0
    %v1383 = vadd.f32 %v1324, %v1382
    %1384 = vmatmul.bf16.gmra.mxu0 %v959
    %v1385 = vpop.f32.mrf.mxu0
    %v1386 = vadd.f32 %v1327, %v1385
    %v1387 = vpop.f32.mrf.mxu0
    %v1388 = vadd.f32 %v1329, %v1387
    %1389 = vmatmul.bf16.gmra.mxu0 %v963
    %v1390 = vpop.f32.mrf.mxu0
    %v1391 = vadd.f32 %v1332, %v1390
    %v1392 = vpop.f32.mrf.mxu0
    %v1393 = vadd.f32 %v1334, %v1392
    %1394 = vmatmul.bf16.gmra.mxu0 %v967
    %v1395 = vpop.f32.mrf.mxu0
    %v1396 = vadd.f32 %v1337, %v1395
    %v1397 = vpop.f32.mrf.mxu0
    %v1398 = vadd.f32 %v1339, %v1397
    %1399 = vmatmul.bf16.gmra.mxu0 %v971
    %v1400 = vpop.f32.mrf.mxu0
    %v1401 = vadd.f32 %v1342, %v1400
    %v1402 = vpop.f32.mrf.mxu0
    %v1403 = vadd.f32 %v1344, %v1402
    %1404 = vmatmul.bf16.gmra.mxu0 %v975
    %v1405 = vpop.f32.mrf.mxu0
    %v1406 = vadd.f32 %v1347, %v1405
    %v1407 = vpop.f32.mrf.mxu0
    %v1408 = vadd.f32 %v1349, %v1407
    %1409 = vmatmul.bf16.gmra.mxu0 %v979
    %v1410 = vpop.f32.mrf.mxu0
    %v1411 = vadd.f32 %v1352, %v1410
    %v1412 = vpop.f32.mrf.mxu0
    %v1413 = vadd.f32 %v1354, %v1412
    %1414 = vmatmul.bf16.gmra.mxu0 %v983
    %v1415 = vpop.f32.mrf.mxu0
    %v1416 = vadd.f32 %v1357, %v1415
    %v1417 = vpop.f32.mrf.mxu0
    %v1418 = vadd.f32 %v1359, %v1417
    %1419 = vmatmul.bf16.gmra.mxu0 %v987
    %v1420 = vpop.f32.mrf.mxu0
    %v1421 = vadd.f32 %v1362, %v1420
    %v1422 = vpop.f32.mrf.mxu0
    %v1423 = vadd.f32 %v1364, %v1422
    %1424 = vmatmul.bf16.gmra.mxu0 %v991
    %v1425 = vpop.f32.mrf.mxu0
    %v1426 = vadd.f32 %v1367, %v1425
    %v1427 = vpop.f32.mrf.mxu0
    %v1428 = vadd.f32 %v1369, %v1427
    %1429 = vdwg.mxu0
    %1430 = vmatpush.bf16.msra.mxu0 %v1220
    %1431 = vmatpush.bf16.msra.mxu0 %v1219
    %1432 = vmatpush.bf16.msra.mxu0 %v1218
    %1433 = vmatpush.bf16.msra.mxu0 %v1217
    %1434 = vmatpush.bf16.msra.mxu0 %v1216
    %1435 = vmatpush.bf16.msra.mxu0 %v1215
    %1436 = vmatpush.bf16.msra.mxu0 %v1214
    %1437 = vmatpush.bf16.msra.mxu0 %v1213
    %1438 = vmatmul.bf16.gmra.mxu0 %v956
    %v1439 = vpop.f32.mrf.mxu0
    %v1440 = vadd.f32 %v1381, %v1439
    %v1441 = vpop.f32.mrf.mxu0
    %v1442 = vadd.f32 %v1383, %v1441
    %1443 = vmatmul.bf16.gmra.mxu0 %v960
    %v1444 = vpop.f32.mrf.mxu0
    %v1445 = vadd.f32 %v1386, %v1444
    %v1446 = vpop.f32.mrf.mxu0
    %v1447 = vadd.f32 %v1388, %v1446
    %1448 = vmatmul.bf16.gmra.mxu0 %v964
    %v1449 = vpop.f32.mrf.mxu0
    %v1450 = vadd.f32 %v1391, %v1449
    %v1451 = vpop.f32.mrf.mxu0
    %v1452 = vadd.f32 %v1393, %v1451
    %1453 = vmatmul.bf16.gmra.mxu0 %v968
    %v1454 = vpop.f32.mrf.mxu0
    %v1455 = vadd.f32 %v1396, %v1454
    %v1456 = vpop.f32.mrf.mxu0
    %v1457 = vadd.f32 %v1398, %v1456
    %1458 = vmatmul.bf16.gmra.mxu0 %v972
    %v1459 = vpop.f32.mrf.mxu0
    %v1460 = vadd.f32 %v1401, %v1459
    %v1461 = vpop.f32.mrf.mxu0
    %v1462 = vadd.f32 %v1403, %v1461
    %1463 = vmatmul.bf16.gmra.mxu0 %v976
    %v1464 = vpop.f32.mrf.mxu0
    %v1465 = vadd.f32 %v1406, %v1464
    %v1466 = vpop.f32.mrf.mxu0
    %v1467 = vadd.f32 %v1408, %v1466
    %1468 = vmatmul.bf16.gmra.mxu0 %v980
    %v1469 = vpop.f32.mrf.mxu0
    %v1470 = vadd.f32 %v1411, %v1469
    %v1471 = vpop.f32.mrf.mxu0
    %v1472 = vadd.f32 %v1413, %v1471
    %1473 = vmatmul.bf16.gmra.mxu0 %v984
    %v1474 = vpop.f32.mrf.mxu0
    %v1475 = vadd.f32 %v1416, %v1474
    %v1476 = vpop.f32.mrf.mxu0
    %v1477 = vadd.f32 %v1418, %v1476
    %1478 = vmatmul.bf16.gmra.mxu0 %v988
    %v1479 = vpop.f32.mrf.mxu0
    %v1480 = vadd.f32 %v1421, %v1479
    %v1481 = vpop.f32.mrf.mxu0
    %v1482 = vadd.f32 %v1423, %v1481
    %1483 = vmatmul.bf16.gmra.mxu0 %v992
    %v1484 = vpop.f32.mrf.mxu0
    %v1485 = vadd.f32 %v1426, %v1484
    %v1486 = vpop.f32.mrf.mxu0
    %v1487 = vadd.f32 %v1428, %v1486
    %1488 = vdwg.mxu0
    %v1489 = vmax.f32 %v1440, 0.0
    %v1490 = vmax.f32 %v1442, 0.0
    %v1491 = vmax.f32 %v1445, 0.0
    %v1492 = vmax.f32 %v1447, 0.0
    %v1493 = vmax.f32 %v1450, 0.0
    %v1494 = vmax.f32 %v1452, 0.0
    %v1495 = vmax.f32 %v1455, 0.0
    %v1496 = vmax.f32 %v1457, 0.0
    %v1497 = vmax.f32 %v1460, 0.0
    %v1498 = vmax.f32 %v1462, 0.0
    %v1499 = vmax.f32 %v1465, 0.0
    %v1500 = vmax.f32 %v1467, 0.0
    %v1501 = vmax.f32 %v1470, 0.0
    %v1502 = vmax.f32 %v1472, 0.0
    %v1503 = vmax.f32 %v1475, 0.0
    %v1504 = vmax.f32 %v1477, 0.0
    %v1505 = vmax.f32 %v1480, 0.0
    %v1506 = vmax.f32 %v1482, 0.0
    %v1507 = vmax.f32 %v1485, 0.0
    %v1508 = vmax.f32 %v1487, 0.0
    %v1509 = vpack.c.bf16 %v1490, %v1489
    %v1510 = vpack.c.bf16 %v1492, %v1491
    %v1511 = vpack.c.bf16 %v1494, %v1493
    %v1512 = vpack.c.bf16 %v1496, %v1495
    %v1513 = vpack.c.bf16 %v1498, %v1497
    %v1514 = vpack.c.bf16 %v1500, %v1499
    %v1515 = vpack.c.bf16 %v1502, %v1501
    %v1516 = vpack.c.bf16 %v1504, %v1503
    %v1517 = vpack.c.bf16 %v1506, %v1505
    %v1518 = vpack.c.bf16 %v1508, %v1507
    %v1519 = vld [vmem:[%s9] sm:$0xf]
    %v1520 = vld [vmem:[%s9 + $0x4] sm:$0xf]
    %v1521 = vld [vmem:[%s9 + $0x8] sm:$0xf]
    %v1522 = vld [vmem:[%s9 + $0xc] sm:$0xf]
    %v1523 = vld [vmem:[%s9 + $0x10] sm:$0xf]
    %v1524 = vld [vmem:[%s9 + $0x14] sm:$0xf]
    %v1525 = vld [vmem:[%s9 + $0x18] sm:$0xf]
    %v1526 = vld [vmem:[%s9 + $0x1c] sm:$0xf]
    %v1527 = vld [vmem:[%s9 + $0x20] sm:$0xf]
    %v1528 = vld [vmem:[%s9 + $0x24] sm:$0xf]
    %v1529 = vld [vmem:[%s9 + $0x28] sm:$0xf]
    %v1530 = vld [vmem:[%s9 + $0x2c] sm:$0xf]
    %v1531 = vld [vmem:[%s9 + $0x30] sm:$0xf]
    %v1532 = vld [vmem:[%s9 + $0x34] sm:$0xf]
    %v1533 = vld [vmem:[%s9 + $0x38] sm:$0xf]
    %v1534 = vld [vmem:[%s9 + $0x3c] sm:$0xf]
    %v1535 = vld [vmem:[%s10] sm:$0x1]
    %v1537 = vperm.slane %v1535, 0
    %v1555 = vunpack.c.l.b16 %v1519
    %v1556 = vunpack.c.l.b16 %v1520
    %v1557 = vunpack.c.l.b16 %v1521
    %v1558 = vunpack.c.l.b16 %v1522
    %v1559 = vunpack.c.l.b16 %v1523
    %v1560 = vunpack.c.l.b16 %v1524
    %v1561 = vunpack.c.l.b16 %v1525
    %v1562 = vunpack.c.l.b16 %v1526
    %v1563 = vunpack.c.l.b16 %v1527
    %v1564 = vunpack.c.l.b16 %v1528
    %v1565 = vunpack.c.l.b16 %v1529
    %v1566 = vunpack.c.l.b16 %v1530
    %v1567 = vunpack.c.l.b16 %v1531
    %v1568 = vunpack.c.l.b16 %v1532
    %v1569 = vunpack.c.l.b16 %v1533
    %v1570 = vunpack.c.l.b16 %v1534
    %v1571 = vpack.c.b16 %v1556, %v1555
    %v1572 = vpack.c.b16 %v1558, %v1557
    %v1573 = vpack.c.b16 %v1560, %v1559
    %v1574 = vpack.c.b16 %v1562, %v1561
    %v1575 = vpack.c.b16 %v1564, %v1563
    %v1576 = vpack.c.b16 %v1566, %v1565
    %v1577 = vpack.c.b16 %v1568, %v1567
    %v1578 = vpack.c.b16 %v1570, %v1569
    %1587 = vmatpush.bf16.msra.mxu0 %v1578
    %1588 = vmatpush.bf16.msra.mxu0 %v1577
    %1589 = vmatpush.bf16.msra.mxu0 %v1576
    %1590 = vmatpush.bf16.msra.mxu0 %v1575
    %1591 = vmatpush.bf16.msra.mxu0 %v1574
    %1592 = vmatpush.bf16.msra.mxu0 %v1573
    %1593 = vmatpush.bf16.msra.mxu0 %v1572
    %1594 = vmatpush.bf16.msra.mxu0 %v1571
    %1595 = vmatmul.bf16.gmra.mxu0 %v1509
    %v1596 = vpop.f32.mrf.mxu0
    %v1597 = vadd.f32 %v1537, %v1596
    %v1598 = vpop.f32.mrf.mxu0
    %v1599 = vadd.f32 %v1537, %v1598
    %1600 = vmatmul.bf16.gmra.mxu0 %v1510
    %v1601 = vpop.f32.mrf.mxu0
    %v1602 = vadd.f32 %v1537, %v1601
    %v1603 = vpop.f32.mrf.mxu0
    %v1604 = vadd.f32 %v1537, %v1603
    %1605 = vmatmul.bf16.gmra.mxu0 %v1511
    %v1606 = vpop.f32.mrf.mxu0
    %v1607 = vadd.f32 %v1537, %v1606
    %v1608 = vpop.f32.mrf.mxu0
    %v1609 = vadd.f32 %v1537, %v1608
    %1610 = vmatmul.bf16.gmra.mxu0 %v1512
    %v1611 = vpop.f32.mrf.mxu0
    %v1612 = vadd.f32 %v1537, %v1611
    %v1613 = vpop.f32.mrf.mxu0
    %v1614 = vadd.f32 %v1537, %v1613
    %1615 = vmatmul.bf16.gmra.mxu0 %v1513
    %v1616 = vpop.f32.mrf.mxu0
    %v1617 = vadd.f32 %v1537, %v1616
    %v1618 = vpop.f32.mrf.mxu0
    %v1619 = vadd.f32 %v1537, %v1618
    %1620 = vmatmul.bf16.gmra.mxu0 %v1514
    %v1621 = vpop.f32.mrf.mxu0
    %v1622 = vadd.f32 %v1537, %v1621
    %v1623 = vpop.f32.mrf.mxu0
    %v1624 = vadd.f32 %v1537, %v1623
    %1625 = vmatmul.bf16.gmra.mxu0 %v1515
    %v1626 = vpop.f32.mrf.mxu0
    %v1627 = vadd.f32 %v1537, %v1626
    %v1628 = vpop.f32.mrf.mxu0
    %v1629 = vadd.f32 %v1537, %v1628
    %1630 = vmatmul.bf16.gmra.mxu0 %v1516
    %v1631 = vpop.f32.mrf.mxu0
    %v1632 = vadd.f32 %v1537, %v1631
    %v1633 = vpop.f32.mrf.mxu0
    %v1634 = vadd.f32 %v1537, %v1633
    %1635 = vmatmul.bf16.gmra.mxu0 %v1517
    %v1636 = vpop.f32.mrf.mxu0
    %v1637 = vadd.f32 %v1537, %v1636
    %v1638 = vpop.f32.mrf.mxu0
    %v1639 = vadd.f32 %v1537, %v1638
    %1640 = vmatmul.bf16.gmra.mxu0 %v1518
    %v1641 = vpop.f32.mrf.mxu0
    %v1642 = vadd.f32 %v1537, %v1641
    %v1643 = vpop.f32.mrf.mxu0
    %v1644 = vadd.f32 %v1537, %v1643
    %1645 = vdwg.mxu0
    %v1646 = vmax.f32 %v1597, 0.0
    %v1647 = vmax.f32 %v1599, 0.0
    %v1648 = vmax.f32 %v1602, 0.0
    %v1649 = vmax.f32 %v1604, 0.0
    %v1650 = vmax.f32 %v1607, 0.0
    %v1651 = vmax.f32 %v1609, 0.0
    %v1652 = vmax.f32 %v1612, 0.0
    %v1653 = vmax.f32 %v1614, 0.0
    %v1654 = vmax.f32 %v1617, 0.0
    %v1655 = vmax.f32 %v1619, 0.0
    %v1656 = vmax.f32 %v1622, 0.0
    %v1657 = vmax.f32 %v1624, 0.0
    %v1658 = vmax.f32 %v1627, 0.0
    %v1659 = vmax.f32 %v1629, 0.0
    %v1660 = vmax.f32 %v1632, 0.0
    %v1661 = vmax.f32 %v1634, 0.0
    %v1662 = vmax.f32 %v1637, 0.0
    %v1663 = vmax.f32 %v1639, 0.0
    %v1664 = vmax.f32 %v1642, 0.0
    %v1665 = vmax.f32 %v1644, 0.0
    %v1666 = vpack.c.bf16 %v1647, %v1646
    %v1667 = vpack.c.bf16 %v1649, %v1648
    %v1668 = vpack.c.bf16 %v1651, %v1650
    %v1669 = vpack.c.bf16 %v1653, %v1652
    %v1670 = vpack.c.bf16 %v1655, %v1654
    %v1671 = vpack.c.bf16 %v1657, %v1656
    %v1672 = vpack.c.bf16 %v1659, %v1658
    %v1673 = vpack.c.bf16 %v1661, %v1660
    %v1674 = vpack.c.bf16 %v1663, %v1662
    %v1675 = vpack.c.bf16 %v1665, %v1664
    %v1676 = vld [vmem:[%s11] sm:$0xf]
    %v1677 = vld [vmem:[%s11 + $0x4] sm:$0xf]
    %v1678 = vld [vmem:[%s11 + $0x8] sm:$0xf]
    %v1679 = vld [vmem:[%s11 + $0xc] sm:$0xf]
    %v1680 = vld [vmem:[%s12] sm:$0x1]
    %v1682 = vperm.slane %v1680, 0
    %v1688 = vunpack.c.l.b16 %v1676
    %v1689 = vunpack.c.l.b16 %v1677
    %v1690 = vunpack.c.l.b16 %v1678
    %v1691 = vunpack.c.l.b16 %v1679
    %v1692 = vpack.c.b16 %v1689, %v1688
    %v1693 = vpack.c.b16 %v1691, %v1690
    %v1697 = vsel %vm315, %v1666, 0
    %v1700 = vsel %vm315, %v1667, 0
    %v1703 = vsel %vm315, %v1668, 0
    %v1706 = vsel %vm315, %v1669, 0
    %v1709 = vsel %vm315, %v1670, 0
    %v1712 = vsel %vm315, %v1671, 0
    %v1715 = vsel %vm315, %v1672, 0
    %v1718 = vsel %vm315, %v1673, 0
    %v1721 = vsel %vm315, %v1674, 0
    %v1724 = vsel %vm315, %v1675, 0
    %1726 = vmatpush.bf16.msra.mxu0 0
    %1727 = vmatpush.bf16.msra.mxu0 0
    %1728 = vmatpush.bf16.msra.mxu0 0
    %1729 = vmatpush.bf16.msra.mxu0 0
    %1730 = vmatpush.bf16.msra.mxu0 0
    %1731 = vmatpush.bf16.msra.mxu0 0
    %1732 = vmatpush.bf16.msra.mxu0 %v1693
    %1733 = vmatpush.bf16.msra.mxu0 %v1692
    %1734 = vmatmul.bf16.gmra.mxu0 %v1697
    %v1735 = vpop.f32.mrf.mxu0
    %v1736 = vadd.f32 %v1682, %v1735
    %v1737 = vpop.f32.mrf.mxu0
    %v1738 = vadd.f32 %v1682, %v1737
    %1739 = vmatmul.bf16.gmra.mxu0 %v1700
    %v1740 = vpop.f32.mrf.mxu0
    %v1741 = vadd.f32 %v1682, %v1740
    %v1742 = vpop.f32.mrf.mxu0
    %v1743 = vadd.f32 %v1682, %v1742
    %1744 = vmatmul.bf16.gmra.mxu0 %v1703
    %v1745 = vpop.f32.mrf.mxu0
    %v1746 = vadd.f32 %v1682, %v1745
    %v1747 = vpop.f32.mrf.mxu0
    %v1748 = vadd.f32 %v1682, %v1747
    %1749 = vmatmul.bf16.gmra.mxu0 %v1706
    %v1750 = vpop.f32.mrf.mxu0
    %v1751 = vadd.f32 %v1682, %v1750
    %v1752 = vpop.f32.mrf.mxu0
    %v1753 = vadd.f32 %v1682, %v1752
    %1754 = vmatmul.bf16.gmra.mxu0 %v1709
    %v1755 = vpop.f32.mrf.mxu0
    %v1756 = vadd.f32 %v1682, %v1755
    %v1757 = vpop.f32.mrf.mxu0
    %v1758 = vadd.f32 %v1682, %v1757
    %1759 = vmatmul.bf16.gmra.mxu0 %v1712
    %v1760 = vpop.f32.mrf.mxu0
    %v1761 = vadd.f32 %v1682, %v1760
    %v1762 = vpop.f32.mrf.mxu0
    %v1763 = vadd.f32 %v1682, %v1762
    %1764 = vmatmul.bf16.gmra.mxu0 %v1715
    %v1765 = vpop.f32.mrf.mxu0
    %v1766 = vadd.f32 %v1682, %v1765
    %v1767 = vpop.f32.mrf.mxu0
    %v1768 = vadd.f32 %v1682, %v1767
    %1769 = vmatmul.bf16.gmra.mxu0 %v1718
    %v1770 = vpop.f32.mrf.mxu0
    %v1771 = vadd.f32 %v1682, %v1770
    %v1772 = vpop.f32.mrf.mxu0
    %v1773 = vadd.f32 %v1682, %v1772
    %1774 = vmatmul.bf16.gmra.mxu0 %v1721
    %v1775 = vpop.f32.mrf.mxu0
    %v1776 = vadd.f32 %v1682, %v1775
    %v1777 = vpop.f32.mrf.mxu0
    %v1778 = vadd.f32 %v1682, %v1777
    %1779 = vmatmul.bf16.gmra.mxu0 %v1724
    %v1780 = vpop.f32.mrf.mxu0
    %v1781 = vadd.f32 %v1682, %v1780
    %v1782 = vpop.f32.mrf.mxu0
    %v1783 = vadd.f32 %v1682, %v1782
    %1784 = vdwg.mxu0
    %v1785 = vld [vmem:[%s13] sm:$0xff]
    %v1786 = vld [vmem:[%s13 + $0x8] sm:$0xff]
    %v1787 = vld [vmem:[%s13 + $0x10] sm:$0xff]
    %v1788 = vld [vmem:[%s13 + $0x18] sm:$0xff]
    %v1789 = vld [vmem:[%s13 + $0x20] sm:$0xff]
    %v1790 = vld [vmem:[%s13 + $0x28] sm:$0xff]
    %v1791 = vld [vmem:[%s13 + $0x30] sm:$0xff]
    %v1792 = vld [vmem:[%s13 + $0x38] sm:$0xff]
    %v1793 = vld [vmem:[%s13 + $0x40] sm:$0xff]
    %v1794 = vld [vmem:[%s13 + $0x48] sm:$0xff]
    %v1795 = vld [vmem:[%s13 + $0x50] sm:$0xff]
    %v1796 = vld [vmem:[%s13 + $0x58] sm:$0xff]
    %v1797 = vld [vmem:[%s13 + $0x60] sm:$0xff]
    %v1798 = vld [vmem:[%s13 + $0x68] sm:$0xff]
    %v1799 = vld [vmem:[%s13 + $0x70] sm:$0xff]
    %v1800 = vld [vmem:[%s13 + $0x78] sm:$0xff]
    %v1801 = vld [vmem:[%s13 + $0x80] sm:$0xff]
    %v1802 = vld [vmem:[%s13 + $0x88] sm:$0xff]
    %v1803 = vld [vmem:[%s13 + $0x90] sm:$0xff]
    %v1804 = vld [vmem:[%s13 + $0x98] sm:$0xff]
    %v1805 = vmul.f32 %v1736, %v1785
    %v1806 = vmul.f32 %v1738, %v1786
    %v1807 = vmul.f32 %v1741, %v1787
    %v1808 = vmul.f32 %v1743, %v1788
    %v1809 = vmul.f32 %v1746, %v1789
    %v1810 = vmul.f32 %v1748, %v1790
    %v1811 = vmul.f32 %v1751, %v1791
    %v1812 = vmul.f32 %v1753, %v1792
    %v1813 = vmul.f32 %v1756, %v1793
    %v1814 = vmul.f32 %v1758, %v1794
    %v1815 = vmul.f32 %v1761, %v1795
    %v1816 = vmul.f32 %v1763, %v1796
    %v1817 = vmul.f32 %v1766, %v1797
    %v1818 = vmul.f32 %v1768, %v1798
    %v1819 = vmul.f32 %v1771, %v1799
    %v1820 = vmul.f32 %v1773, %v1800
    %v1821 = vmul.f32 %v1776, %v1801
    %v1822 = vmul.f32 %v1778, %v1802
    %v1823 = vmul.f32 %v1781, %v1803
    %v1824 = vmul.f32 %v1783, %v1804
    %v1825 = vpack.c.bf16 %v1806, %v1805
    %v1826 = vpack.c.bf16 %v1808, %v1807
    %v1827 = vpack.c.bf16 %v1810, %v1809
    %v1828 = vpack.c.bf16 %v1812, %v1811
    %v1829 = vpack.c.bf16 %v1814, %v1813
    %v1830 = vpack.c.bf16 %v1816, %v1815
    %v1831 = vpack.c.bf16 %v1818, %v1817
    %v1832 = vpack.c.bf16 %v1820, %v1819
    %v1833 = vpack.c.bf16 %v1822, %v1821
    %v1834 = vpack.c.bf16 %v1824, %v1823
    %v1835 = vld [vmem:[%s14] sm:$0xff]
    %v1836 = vld [vmem:[%s14 + $0x8] sm:$0xff]
    %v1839 = vunpack.c.l.b16 %v1835
    %v1840 = vunpack.c.h.b16 %v1835
    %v1841 = vunpack.c.l.b16 %v1836
    %v1842 = vunpack.c.h.b16 %v1836
    %v1843 = vpack.c.b16 %v1841, %v1839
    %v1844 = vpack.c.b16 %v1842, %v1840
    %v1847 = vsel %vm315, %v1844, 0
    %1849 = vmatpush.bf16.msra.mxu0 %v1832
    %1850 = vmatpush.bf16.msra.mxu0 %v1831
    %1851 = vmatpush.bf16.msra.mxu0 %v1830
    %1852 = vmatpush.bf16.msra.mxu0 %v1829
    %1853 = vmatpush.bf16.msra.mxu0 %v1828
    %1854 = vmatpush.bf16.msra.mxu0 %v1827
    %1855 = vmatpush.bf16.msra.mxu0 %v1826
    %1856 = vmatpush.bf16.msra.mxu0 %v1825
    %1857 = vmatmul.bf16.gmra.mxu0 %v1843
    %v1858 = vpop.f32.mrf.mxu0
    %v1859 = vadd.f32 0.0, %v1858
    %v1860 = vpop.f32.mrf.mxu0
    %v1861 = vadd.f32 0.0, %v1860
    %1862 = vdwg.mxu0
    %1863 = vmatpush.bf16.msra.mxu0 0
    %1864 = vmatpush.bf16.msra.mxu0 0
    %1865 = vmatpush.bf16.msra.mxu0 0
    %1866 = vmatpush.bf16.msra.mxu0 0
    %1867 = vmatpush.bf16.msra.mxu0 0
    %1868 = vmatpush.bf16.msra.mxu0 0
    %1869 = vmatpush.bf16.msra.mxu0 %v1834
    %1870 = vmatpush.bf16.msra.mxu0 %v1833
    %1871 = vmatmul.bf16.gmra.mxu0 %v1847
    %v1872 = vpop.f32.mrf.mxu0
    %v1873 = vadd.f32 %v1859, %v1872
    %v1874 = vpop.f32.mrf.mxu0
    %v1875 = vadd.f32 %v1861, %v1874
    %1876 = vdwg.mxu0
    %v1877 = vpack.c.bf16 %v1875, %v1873
    %v1878 = vld [vmem:[%s15] sm:$0xf]
    %v1879 = vld [vmem:[%s15 + $0x4] sm:$0x1]
    %v1880 = vld [vmem:[%s16] sm:$0x1]
    %v1882 = vperm.slane %v1880, 0
    %v1886 = vunpack.c.l.b16 %v1878
    %v1887 = vunpack.c.l.b16 %v1879
    %v1888 = vpack.c.b16 %v1887, %v1886
    %vm1889 = vcmask 80896
    %v1891 = vsel %vm1889, %v1877, 0
    %vm1893 = vcmask 1044480
    %v1895 = vsel %vm1893, %v1888, 0
    %1897 = vmatpush.bf16.msra.mxu0 0
    %1898 = vmatpush.bf16.msra.mxu0 0
    %1899 = vmatpush.bf16.msra.mxu0 0
    %1900 = vmatpush.bf16.msra.mxu0 0
    %1901 = vmatpush.bf16.msra.mxu0 0
    %1902 = vmatpush.bf16.msra.mxu0 0
    %1903 = vmatpush.bf16.msra.mxu0 0
    %1904 = vmatpush.bf16.msra.mxu0 %v1895
    %1905 = vmatmul.bf16.gmra.mxu0 %v1891
    %v1906 = vpop.f32.mrf.mxu0
    %v1907 = vadd.f32 %v1882, %v1906
    %v1908 = vpop.f32.mrf.mxu0
    %v1909 = vadd.f32 %v1882, %v1908
    %1910 = vdwg.mxu0
    %v1911 = vmax.f32 %v1907, 0.0
    %v1912 = vmax.f32 %v1909, 0.0
    %v1913 = vpack.c.bf16 %v1912, %v1911
    %v1914 = vld [vmem:[%s17] sm:$0xf]
    %v1915 = vld [vmem:[%s17 + $0x4] sm:$0xf]
    %v1916 = vld [vmem:[%s17 + $0x8] sm:$0xf]
    %v1917 = vld [vmem:[%s17 + $0xc] sm:$0xf]
    %v1918 = vld [vmem:[%s17 + $0x10] sm:$0xf]
    %v1919 = vld [vmem:[%s17 + $0x14] sm:$0xf]
    %v1920 = vld [vmem:[%s17 + $0x18] sm:$0xf]
    %v1921 = vld [vmem:[%s17 + $0x1c] sm:$0xf]
    %v1922 = vld [vmem:[%s17 + $0x20] sm:$0xf]
    %v1923 = vld [vmem:[%s17 + $0x24] sm:$0xf]
    %v1924 = vld [vmem:[%s17 + $0x28] sm:$0xf]
    %v1925 = vld [vmem:[%s17 + $0x2c] sm:$0xf]
    %v1926 = vld [vmem:[%s17 + $0x30] sm:$0xf]
    %v1927 = vld [vmem:[%s17 + $0x34] sm:$0xf]
    %v1928 = vld [vmem:[%s17 + $0x38] sm:$0xf]
    %v1929 = vld [vmem:[%s17 + $0x3c] sm:$0xf]
    %v1930 = vld [vmem:[%s18] sm:$0x1]
    %v1932 = vperm.slane %v1930, 0
    %v1950 = vunpack.c.l.b16 %v1914
    %v1951 = vunpack.c.l.b16 %v1915
    %v1952 = vunpack.c.l.b16 %v1916
    %v1953 = vunpack.c.l.b16 %v1917
    %v1954 = vunpack.c.l.b16 %v1918
    %v1955 = vunpack.c.l.b16 %v1919
    %v1956 = vunpack.c.l.b16 %v1920
    %v1957 = vunpack.c.l.b16 %v1921
    %v1958 = vunpack.c.l.b16 %v1922
    %v1959 = vunpack.c.l.b16 %v1923
    %v1960 = vunpack.c.l.b16 %v1924
    %v1961 = vunpack.c.l.b16 %v1925
    %v1962 = vunpack.c.l.b16 %v1926
    %v1963 = vunpack.c.l.b16 %v1927
    %v1964 = vunpack.c.l.b16 %v1928
    %v1965 = vunpack.c.l.b16 %v1929
    %v1966 = vpack.c.b16 %v1951, %v1950
    %v1967 = vpack.c.b16 %v1953, %v1952
    %v1968 = vpack.c.b16 %v1955, %v1954
    %v1969 = vpack.c.b16 %v1957, %v1956
    %v1970 = vpack.c.b16 %v1959, %v1958
    %v1971 = vpack.c.b16 %v1961, %v1960
    %v1972 = vpack.c.b16 %v1963, %v1962
    %v1973 = vpack.c.b16 %v1965, %v1964
    %1982 = vmatpush.bf16.msra.mxu0 %v1973
    %1983 = vmatpush.bf16.msra.mxu0 %v1972
    %1984 = vmatpush.bf16.msra.mxu0 %v1971
    %1985 = vmatpush.bf16.msra.mxu0 %v1970
    %1986 = vmatpush.bf16.msra.mxu0 %v1969
    %1987 = vmatpush.bf16.msra.mxu0 %v1968
    %1988 = vmatpush.bf16.msra.mxu0 %v1967
    %1989 = vmatpush.bf16.msra.mxu0 %v1966
    %1990 = vmatmul.bf16.gmra.mxu0 %v1913
    %v1991 = vpop.f32.mrf.mxu0
    %v1992 = vadd.f32 %v1932, %v1991
    %v1993 = vpop.f32.mrf.mxu0
    %v1994 = vadd.f32 %v1932, %v1993
    %1995 = vdwg.mxu0
    %1996 = vst.msk [vmem:[#allocation7] sm:$0xff] %vm1889, %v1992
    %1997 = vst.msk [vmem:[#allocation7 + $0x8] sm:$0xff] %vm1889, %v1994
    // Predicated region
    $region86: #{tpu_custom_call.1} parent=1 // pred_check
      _
    $region87: #{tpu_custom_call.1} parent=1 // pred_check_branch
      %1999 = sbr.rel (0) target = $region89
    $region88: #{tpu_custom_call.1} parent=1 // pred_region
      %2001 = vsyncadd [#allocation4], 0
      %s2002 = sshll.u32 [#allocation7], 4
      %s2003 = int_to_ptr.vmem [resolvable:$true] %s2002
      %s2004 = sshll.u32 %s19, 4
      %s2005 = int_to_ptr.hbm [resolvable:$true] %s2004
      %2010 = dma.vmem_to_hbm [thread:$0]  %s2003, 256, %s2005, [#allocation4], 128, 128, 8
    $region89: #{tpu_custom_call.1} parent=1 // pred_fallthru
      _
    // Predicated region
    $region90: #{tpu_custom_call.1} parent=1 // pred_check
      _
    $region91: #{tpu_custom_call.1} parent=1 // pred_check_branch
      %2012 = sbr.rel (0) target = $region93
    $region92: #{tpu_custom_call.1} parent=1 // pred_region
      %2014 = dma.done [#allocation4], 256
    $region93: #{tpu_custom_call.1} parent=1 // pred_fallthru
      _
    %2015 = vsyncpa [#allocation3], 1
    %2016 = vsyncpa [#allocation6], 1
    %2017 = vsyncpa [#allocation4], 1

</llo_original>
